<compile_context>
chip_gen: v7x
topology: tpu7x:2x2x1
jax: 0.10.0
libtpu: 0.0.40
codegen_flags: <defaults>
</compile_context>

<pallas_src>
import jax
import jax.numpy as jnp
from jax.experimental import pallas as pl
from jax.experimental.pallas import tpu as pltpu


# ----------------------------------------------------------------------------
# Fused forward kernel (whole autoencoder in one pallas_call, no grid)
# ----------------------------------------------------------------------------
def _make_fused_kernel(N, cfg):
    W = cfg['W']
    L = N * W
    enc = cfg['enc']        # tuple of (K, pad_l, use_mxu) per encoder conv
    dec = cfg['dec']        # tuple of (K, pad_l, use_mxu) per decoder tconv
    fin = cfg['fin']        # (K, pad_l, use_mxu) for the final 1x1 conv

    def kernel(*refs):
        *in_refs, o_ref = refs
        it = iter(in_refs)
        x_ref = next(it)
        slab = x_ref[...].astype(jnp.float32)            # (1, L), column = n*W + w

        # Within-block frequency index, computed once and shared by every conv
        # layer's boundary masks (masks depend only on the tap shift).
        w_idx = jax.lax.broadcasted_iota(jnp.int32, (1, L), 1) % W
        mask_cache = {}

        def tap(slab_v, s):
            """Shift every batch block by s along frequency, zero-filling the pad.

            rolled[:, n*W + w] = slab[:, n*W + w + s]; positions whose source index
            (w + s) falls outside [0, W) are masked to 0.  One XLU roll + one VPU
            select for the whole batch (no per-batch pad/slice/concat chains).
            """
            if s == 0:
                return slab_v
            if s not in mask_cache:
                mask_cache[s] = jnp.logical_and(w_idx + s >= 0, w_idx + s < W)
            rolled = pltpu.roll(slab_v, shift=(-s) % L, axis=1)
            return jnp.where(mask_cache[s], rolled, 0.0)

        def conv(slab_v, meta, w_ref, b_ref, relu):
            K, pad_l, use_mxu = meta
            taps = [tap(slab_v, k - pad_l) for k in range(K)]
            if use_mxu:
                # One (Cout, K*Cin) x (K*Cin, N*W) MXU matmul for the whole batch;
                # bf16 operands, f32 accumulation.
                big = taps[0] if K == 1 else jnp.concatenate(taps, axis=0)
                acc = jnp.dot(w_ref[...], big.astype(jnp.bfloat16),
                              preferred_element_type=jnp.float32) + b_ref[...]
            else:
                # Degenerate contraction (Cin == 1, small K): K rank-1 FMAs on the
                # VPU; accumulator starts as the broadcast bias (no zeros init).
                cout = w_ref.shape[0]
                w = w_ref[...]
                acc = jnp.broadcast_to(b_ref[...], (cout, L))
                for k in range(K):
                    acc = acc + w[:, k:k + 1] * taps[k]
            return jnp.maximum(acc, 0.0) if relu else acc

        # ---- Encoder: [ZeroPad2d(right = K-1) -> Conv2d(1xK) -> ReLU] * L ----
        for meta in enc:
            w_ref, b_ref = next(it), next(it)
            slab = conv(slab, meta, w_ref, b_ref, relu=True)

        # ---- NCHW flatten + encoder dense + ReLU ----
        # slab is (C, N*W).  One 128-aligned lane-split reshape exposes the batch
        # axis; a single channel-batched MXU contraction over w plus a sum over c
        # realises x_flat @ Wd.T without the O(N*C) per-channel slice/concat chain.
        wd3_ref, bd_ref = next(it), next(it)
        C = slab.shape[0]
        slab3 = slab.reshape(C, N, W).astype(jnp.bfloat16)            # (C, N, W)
        partial = jnp.einsum('cnw,cdw->cnd', slab3, wd3_ref[...],
                             preferred_element_type=jnp.float32)       # (C, N, Dout)
        y = jnp.maximum(jnp.sum(partial, axis=0) + bd_ref[...], 0.0)   # (N, Dout)

        # ---- Decoder dense + ReLU ----
        wd2_ref, bd2_ref = next(it), next(it)
        z = jnp.dot(y.astype(jnp.bfloat16), wd2_ref[...],
                    preferred_element_type=jnp.float32)                # (N, W)
        z = jnp.maximum(z + bd2_ref[...], 0.0)
        # (N, W) -> (1, N*W): put the batch back into lane blocks.  N sublane-row
        # slices + one lane concat (known-good ops; tiny at small N -- a single
        # lane-merge reshape is the O(1) alternative once N grows).
        slab = (jnp.concatenate([z[n:n + 1, :] for n in range(N)], axis=1)
                if N > 1 else z)

        # ---- Decoder: [ConvTranspose2d(1xK, stride 1, pad (0,1)) -> ReLU] * L ----
        #      == correlation with the flipped kernel + symmetric zero pad K-2.
        for meta in dec:
            w_ref, b_ref = next(it), next(it)
            slab = conv(slab, meta, w_ref, b_ref, relu=True)

        # ---- Final Conv2d(1x1), no activation ----
        wf_ref, bf_ref = next(it), next(it)
        out = conv(slab, fin, wf_ref, bf_ref, relu=False)              # (1, N*W)

        o_ref[...] = out.astype(o_ref.dtype)

    return kernel


def autoencoder_forward(x, kparams, cfg):
    """x: (N, 1, 1, W) NCHW float32 -> (N, 1, 1, W)."""
    N = x.shape[0]
    W = cfg['W']
    assert x.shape[1:] == (1, 1, W)
    x2 = x.reshape(1, N * W)            # host-side relayout: column index = n*W + w
    # TODO(synk): for large batch on v7x, add a batch grid axis with
    # dimension_semantics=("parallel",) to use both TensorCores, and raise
    # vmem_limit_bytes / tile the dense contraction once weights outgrow 32 MiB.
    out = pl.pallas_call(
        _make_fused_kernel(N, cfg),
        out_shape=jax.ShapeDtypeStruct((1, N * W), x.dtype),
    )(x2, *kparams)
    return out.reshape(N, 1, 1, W)


# ----------------------------------------------------------------------------
# One-time parameter re-layout (hoisted out of the forward pass)
# ----------------------------------------------------------------------------
def prepare_kernel_params(params, model_dict):
    feature = model_dict['frequency_bins'][1] - model_dict['frequency_bins'][0]
    assert model_dict['encoder_act'] == 'relu' and model_dict['decoder_act'] == 'relu'
    # TODO(synk): non-ReLU activations, the len(dense)==0 decoder-input branch, the
    # args.depthwiseConv grouped-conv variant, and final-conv Cout > 1 are module
    # config branches not covered by this kernel.
    kparams = []

    def conv_entry(w2d, b, cout, cin, kw):
        # MXU gated on contraction depth only; Cin==1 shallow layers stay on the
        # VPU as rank-1 FMAs (f32 weights there, bf16 for MXU layers).
        use_mxu = not (cin == 1 and kw * cin < 8)
        kparams.append(w2d.astype(jnp.bfloat16) if use_mxu else w2d.astype(jnp.float32))
        kparams.append(b.reshape(cout, 1).astype(jnp.float32))
        return use_mxu

    # Encoder Conv2d weights: (Cout, Cin, 1, K) -> (Cout, K*Cin), column = k*Cin + i.
    enc_meta = []
    for (w, b) in params['enc_convs']:
        cout, cin, kh, kw = w.shape
        assert kh == 1
        w2d = jnp.transpose(w[:, :, 0, :], (0, 2, 1)).reshape(cout, kw * cin)
        use_mxu = conv_entry(w2d, b, cout, cin, kw)
        enc_meta.append((kw, 0, use_mxu))

    # Encoder dense: (Dout, C*W) -> (C, Dout, W) bf16 (f32 accumulation in-kernel).
    wd, bd = params['enc_dense']
    dout, din = wd.shape
    assert din % feature == 0
    c_last = din // feature
    wd3 = jnp.transpose(wd.reshape(dout, c_last, feature), (1, 0, 2)).astype(jnp.bfloat16)
    kparams += [wd3, bd.reshape(1, dout).astype(jnp.float32)]

    # Decoder dense: store transposed (Dbottleneck, W) so the lane dim is W.
    wd2, bd2 = params['dec_dense']
    kparams += [jnp.transpose(wd2).astype(jnp.bfloat16),
                bd2.reshape(1, -1).astype(jnp.float32)]

    # Decoder ConvTranspose2d: (Cin, Cout, 1, K) -> flipped-correlation (Cout, K*Cin).
    dec_meta = []
    for (w, b) in params['dec_tconvs']:
        cin, cout, kh, kw = w.shape
        assert kh == 1
        assert kw >= 2, "ConvTranspose2d with padding=(0,1) needs kernel width >= 2"
        w2d = jnp.transpose(w[:, :, 0, ::-1], (1, 2, 0)).reshape(cout, kw * cin)
        use_mxu = conv_entry(w2d, b, cout, cin, kw)
        dec_meta.append((kw, kw - 2, use_mxu))

    # Final Conv2d 1x1 (no activation).
    wf, bf = params['dec_final']
    cout_f, cin_f, khf, kwf = wf.shape
    assert khf == 1 and kwf == 1
    assert cout_f == 1
    use_mxu_f = conv_entry(wf[:, :, 0, 0], bf, cout_f, cin_f, kwf)
    fin_meta = (kwf, 0, use_mxu_f)

    cfg = dict(W=feature, enc=tuple(enc_meta), dec=tuple(dec_meta), fin=fin_meta)
    return tuple(kparams), cfg


# ----------------------------------------------------------------------------
# Pure-JAX reference (torch-layout params) for the correctness check
# ----------------------------------------------------------------------------
def _conv1d_ref(x, w_eff, b, pad, relu):
    # x: (N, Cin, W), w_eff: (K, Cout, Cin), b: (Cout,)
    K, cout, _ = w_eff.shape
    W = x.shape[-1]
    xp = jnp.pad(x, ((0, 0), (0, 0), (pad[0], pad[1])))
    out = b.reshape(1, cout, 1)
    for k in range(K):
        out = out + jnp.einsum('oi,niw->now', w_eff[k], xp[:, :, k:k + W])
    return jnp.maximum(out, 0.0) if relu else out


def reference_forward(x, params, model_dict):
    feature = model_dict['frequency_bins'][1] - model_dict['frequency_bins'][0]
    N = x.shape[0]
    h = x[:, :, 0, :]                                    # (N, 1, W)

    for (w, b) in params['enc_convs']:
        K = w.shape[-1]
        w_eff = jnp.transpose(w[:, :, 0, :], (2, 0, 1))  # (K, Cout, Cin)
        h = _conv1d_ref(h, w_eff, b, (0, K - 1), True)

    h = h.reshape(N, -1)                                 # NCHW flatten: C then W
    wd, bd = params['enc_dense']
    h = jnp.maximum(h @ wd.T + bd, 0.0)
    wd2, bd2 = params['dec_dense']
    h = jnp.maximum(h @ wd2.T + bd2, 0.0)
    h = h.reshape(N, 1, feature)

    for (w, b) in params['dec_tconvs']:
        K = w.shape[-1]
        p = 1                                            # ConvTranspose2d padding=(0,1)
        w_eff = jnp.transpose(w[:, :, 0, ::-1], (2, 1, 0))
        h = _conv1d_ref(h, w_eff, b, (K - 1 - p, K - 1 - p), True)

    w, b = params['dec_final']
    w_eff = jnp.transpose(w[:, :, 0, :], (2, 0, 1))
    h = _conv1d_ref(h, w_eff, b, (0, 0), False)
    return h[:, :, None, :]


# ----------------------------------------------------------------------------
# Deterministic parameter init (shapes follow the PyTorch module __init__)
# ----------------------------------------------------------------------------
def make_params(key, model_dict):
    feature = model_dict['frequency_bins'][1] - model_dict['frequency_bins'][0]
    enc_layers, enc_filt = model_dict['encoder'], model_dict['encoder_filter']
    dec_layers, dec_filt = model_dict['decoder'], model_dict['decoder_filter']
    dense = model_dict['dense']

    keys = iter(jax.random.split(key, 64))

    def init(shape, fan_in):
        return jax.random.normal(next(keys), shape, jnp.float32) / jnp.sqrt(float(fan_in))

    params = {}
    enc_convs, cin = [], 1
    for cout, (kh, kw) in zip(enc_layers, enc_filt):
        assert kh == 1, "model uses kernel height 1"
        enc_convs.append((init((cout, cin, kh, kw), cin * kh * kw),
                          init((cout,), cin * kh * kw)))
        cin = cout
    params['enc_convs'] = enc_convs

    din = enc_layers[-1] * feature
    params['enc_dense'] = (init((dense[0], din), din), init((dense[0],), din))
    params['dec_dense'] = (init((feature, dense[0]), dense[0]), init((feature,), dense[0]))

    dec_tconvs, cin = [], 1
    for i, (cout, (kh, kw)) in enumerate(zip(dec_layers, dec_filt)):
        assert kh == 1
        if i == len(dec_layers) - 1:
            params['dec_final'] = (init((cout, cin, kh, kw), cin * kh * kw),
                                   init((cout,), cin * kh * kw))
        else:
            # ConvTranspose2d weight layout: (Cin, Cout, kH, kW)
            dec_tconvs.append((init((cin, cout, kh, kw), cin * kh * kw),
                               init((cout,), cin * kh * kw)))
        cin = cout
    params['dec_tconvs'] = dec_tconvs
    return params


# ----------------------------------------------------------------------------
if __name__ == "__main__":
    # Small config consistent with the module's structure (shrunk default dict).
    model_dict = {
        'frequency_bins': [0, 128],          # feature_dim = 128 (lane-aligned)
        'encoder': [8, 16],
        'decoder': [16, 8, 1],
        'encoder_filter': [[1, 3], [1, 3]],
        'decoder_filter': [[1, 3], [1, 3], [1, 1]],
        'encoder_act': 'relu',
        'decoder_act': 'relu',
        'dense': [16],
    }
    feature_dim = model_dict['frequency_bins'][1] - model_dict['frequency_bins'][0]

    key = jax.random.PRNGKey(0)
    k_params, k_x = jax.random.split(key)
    params = make_params(k_params, model_dict)
    kparams, cfg = prepare_kernel_params(params, model_dict)   # one-time re-layout

    # PyTorch-style NCHW input: (batch, channels=1, H=1, W=feature_dim)
    x = jax.random.normal(k_x, (2, 1, 1, feature_dim), jnp.float32)

    fwd = jax.jit(lambda xx: autoencoder_forward(xx, kparams, cfg))
    y = fwd(x)
    jax.block_until_ready(y)

    # Correctness check against a pure-JAX f32 reference of the same math.
    # Tolerance loosened vs the previous all-f32 kernel: MXU layers now use bf16
    # operands (f32 accumulation via preferred_element_type).
    y_ref = reference_forward(x, params, model_dict)
    assert y.shape == (2, 1, 1, feature_dim)
    assert jnp.allclose(y, y_ref, rtol=5e-2, atol=5e-2), "Pallas output mismatch vs reference"

    print("KERNEL_OK")
</pallas_src>

<mosaic_0001>
module attributes {stable_mosaic.version = 11 : i64} {
  func.func @kernel(%arg0: memref<1x256xf32, #tpu.memory_space<vmem>>, %arg1: memref<8x3xf32, #tpu.memory_space<vmem>>, %arg2: memref<8x1xf32, #tpu.memory_space<vmem>>, %arg3: memref<16x24xbf16, #tpu.memory_space<vmem>>, %arg4: memref<16x1xf32, #tpu.memory_space<vmem>>, %arg5: memref<16x16x128xbf16, #tpu.memory_space<vmem>>, %arg6: memref<1x16xf32, #tpu.memory_space<vmem>>, %arg7: memref<16x128xbf16, #tpu.memory_space<vmem>>, %arg8: memref<1x128xf32, #tpu.memory_space<vmem>>, %arg9: memref<16x3xf32, #tpu.memory_space<vmem>>, %arg10: memref<16x1xf32, #tpu.memory_space<vmem>>, %arg11: memref<8x48xbf16, #tpu.memory_space<vmem>>, %arg12: memref<8x1xf32, #tpu.memory_space<vmem>>, %arg13: memref<1x8xbf16, #tpu.memory_space<vmem>>, %arg14: memref<1x1xf32, #tpu.memory_space<vmem>>, %arg15: memref<1x256xf32, #tpu.memory_space<vmem>>) attributes {dimension_semantics = [], scalar_prefetch = 0 : i64, scratch_operands = 0 : i64, tpu.core_type = #tpu.core_type<tc>} {
    %c0 = arith.constant 0 : index
    %c0_0 = arith.constant 0 : index
    %0 = vector.load %arg0[%c0, %c0_0] : memref<1x256xf32, #tpu.memory_space<vmem>>, vector<1x256xf32>
    %1 = tpu.iota {dimensions = array<i32: 1>} : vector<1x256xi32>
    %c128_i32 = arith.constant 128 : i32
    %c0_i32 = arith.constant 0 : i32
    %2 = arith.cmpi eq, %c128_i32, %c0_i32 : i32
    %c1_i32 = arith.constant 1 : i32
    %3 = arith.select %2, %c1_i32, %c128_i32 : i32
    %4 = vector.broadcast %3 : i32 to vector<1x256xi32>
    %5 = arith.remsi %1, %4 : vector<1x256xi32>
    %c0_i32_1 = arith.constant 0 : i32
    %6 = vector.broadcast %c0_i32_1 : i32 to vector<1x256xi32>
    %7 = arith.cmpi ne, %5, %6 : vector<1x256xi32>
    %c0_i32_2 = arith.constant 0 : i32
    %8 = vector.broadcast %c0_i32_2 : i32 to vector<1x256xi32>
    %9 = arith.cmpi slt, %5, %8 : vector<1x256xi32>
    %c0_i32_3 = arith.constant 0 : i32
    %10 = arith.cmpi slt, %3, %c0_i32_3 : i32
    %11 = vector.broadcast %10 : i1 to vector<1x256xi1>
    %12 = vector.broadcast %11 : vector<1x256xi1> to vector<1x256xi1>
    %13 = arith.xori %9, %12 : vector<1x256xi1>
    %14 = arith.andi %13, %7 : vector<1x256xi1>
    %15 = vector.broadcast %3 : i32 to vector<1x256xi32>
    %16 = arith.addi %5, %15 : vector<1x256xi32>
    %17 = arith.select %14, %16, %5 : vector<1x256xi1>, vector<1x256xi32>
    %c1_i32_4 = arith.constant 1 : i32
    %18 = vector.broadcast %c1_i32_4 : i32 to vector<1x256xi32>
    %19 = arith.addi %17, %18 : vector<1x256xi32>
    %c0_i32_5 = arith.constant 0 : i32
    %20 = vector.broadcast %c0_i32_5 : i32 to vector<1x256xi32>
    %21 = arith.cmpi sge, %19, %20 : vector<1x256xi32>
    %c1_i32_6 = arith.constant 1 : i32
    %22 = vector.broadcast %c1_i32_6 : i32 to vector<1x256xi32>
    %23 = arith.addi %17, %22 : vector<1x256xi32>
    %c128_i32_7 = arith.constant 128 : i32
    %24 = vector.broadcast %c128_i32_7 : i32 to vector<1x256xi32>
    %25 = arith.cmpi slt, %23, %24 : vector<1x256xi32>
    %26 = arith.andi %21, %25 : vector<1x256xi1>
    %c255_i32 = arith.constant 255 : i32
    %27 = tpu.dynamic_rotate %0 by %c255_i32 dim 1 : vector<1x256xf32>, i32 -> vector<1x256xf32>
    %cst = arith.constant 0.000000e+00 : f32
    %28 = vector.broadcast %cst : f32 to vector<1x256xf32>
    %29 = arith.select %26, %27, %28 : vector<1x256xi1>, vector<1x256xf32>
    %c2_i32 = arith.constant 2 : i32
    %30 = vector.broadcast %c2_i32 : i32 to vector<1x256xi32>
    %31 = arith.addi %17, %30 : vector<1x256xi32>
    %c0_i32_8 = arith.constant 0 : i32
    %32 = vector.broadcast %c0_i32_8 : i32 to vector<1x256xi32>
    %33 = arith.cmpi sge, %31, %32 : vector<1x256xi32>
    %c2_i32_9 = arith.constant 2 : i32
    %34 = vector.broadcast %c2_i32_9 : i32 to vector<1x256xi32>
    %35 = arith.addi %17, %34 : vector<1x256xi32>
    %c128_i32_10 = arith.constant 128 : i32
    %36 = vector.broadcast %c128_i32_10 : i32 to vector<1x256xi32>
    %37 = arith.cmpi slt, %35, %36 : vector<1x256xi32>
    %38 = arith.andi %33, %37 : vector<1x256xi1>
    %c254_i32 = arith.constant 254 : i32
    %39 = tpu.dynamic_rotate %0 by %c254_i32 dim 1 : vector<1x256xf32>, i32 -> vector<1x256xf32>
    %cst_11 = arith.constant 0.000000e+00 : f32
    %40 = vector.broadcast %cst_11 : f32 to vector<1x256xf32>
    %41 = arith.select %38, %39, %40 : vector<1x256xi1>, vector<1x256xf32>
    %c0_12 = arith.constant 0 : index
    %c0_13 = arith.constant 0 : index
    %42 = vector.load %arg1[%c0_12, %c0_13] : memref<8x3xf32, #tpu.memory_space<vmem>>, vector<8x3xf32>
    %c0_14 = arith.constant 0 : index
    %c0_15 = arith.constant 0 : index
    %43 = vector.load %arg2[%c0_14, %c0_15] : memref<8x1xf32, #tpu.memory_space<vmem>>, vector<8x1xf32>
    %44 = vector.shape_cast %43 : vector<8x1xf32> to vector<8x1xf32>
    %45 = vector.broadcast %44 : vector<8x1xf32> to vector<8x256xf32>
    %46 = vector.extract_strided_slice %42 {offsets = [0, 0], sizes = [8, 1], strides = [1, 1]} : vector<8x3xf32> to vector<8x1xf32>
    %47 = vector.broadcast %46 : vector<8x1xf32> to vector<8x256xf32>
    %48 = vector.broadcast %0 : vector<1x256xf32> to vector<8x256xf32>
    %49 = arith.mulf %47, %48 : vector<8x256xf32>
    %50 = arith.addf %45, %49 : vector<8x256xf32>
    %51 = vector.extract_strided_slice %42 {offsets = [0, 1], sizes = [8, 1], strides = [1, 1]} : vector<8x3xf32> to vector<8x1xf32>
    %52 = vector.broadcast %51 : vector<8x1xf32> to vector<8x256xf32>
    %53 = vector.broadcast %29 : vector<1x256xf32> to vector<8x256xf32>
    %54 = arith.mulf %52, %53 : vector<8x256xf32>
    %55 = arith.addf %50, %54 : vector<8x256xf32>
    %56 = vector.extract_strided_slice %42 {offsets = [0, 2], sizes = [8, 1], strides = [1, 1]} : vector<8x3xf32> to vector<8x1xf32>
    %57 = vector.broadcast %56 : vector<8x1xf32> to vector<8x256xf32>
    %58 = vector.broadcast %41 : vector<1x256xf32> to vector<8x256xf32>
    %59 = arith.mulf %57, %58 : vector<8x256xf32>
    %60 = arith.addf %55, %59 : vector<8x256xf32>
    %cst_16 = arith.constant 0.000000e+00 : f32
    %61 = vector.broadcast %cst_16 : f32 to vector<8x256xf32>
    %62 = arith.maximumf %60, %61 : vector<8x256xf32>
    %c255_i32_17 = arith.constant 255 : i32
    %63 = tpu.dynamic_rotate %62 by %c255_i32_17 dim 1 : vector<8x256xf32>, i32 -> vector<8x256xf32>
    %cst_18 = arith.constant 0.000000e+00 : f32
    %64 = vector.shape_cast %26 : vector<1x256xi1> to vector<1x256xi1>
    %65 = vector.broadcast %64 : vector<1x256xi1> to vector<8x256xi1>
    %66 = vector.broadcast %cst_18 : f32 to vector<8x256xf32>
    %67 = arith.select %65, %63, %66 : vector<8x256xi1>, vector<8x256xf32>
    %c254_i32_19 = arith.constant 254 : i32
    %68 = tpu.dynamic_rotate %62 by %c254_i32_19 dim 1 : vector<8x256xf32>, i32 -> vector<8x256xf32>
    %cst_20 = arith.constant 0.000000e+00 : f32
    %69 = vector.shape_cast %38 : vector<1x256xi1> to vector<1x256xi1>
    %70 = vector.broadcast %69 : vector<1x256xi1> to vector<8x256xi1>
    %71 = vector.broadcast %cst_20 : f32 to vector<8x256xf32>
    %72 = arith.select %70, %68, %71 : vector<8x256xi1>, vector<8x256xf32>
    %73 = tpu.concatenate %62, %67, %72 in 0 : vector<8x256xf32>, vector<8x256xf32>, vector<8x256xf32> -> vector<24x256xf32>
    %c0_21 = arith.constant 0 : index
    %c0_22 = arith.constant 0 : index
    %74 = vector.load %arg3[%c0_21, %c0_22] : memref<16x24xbf16, #tpu.memory_space<vmem>>, vector<16x24xbf16>
    %75 = arith.truncf %73 : vector<24x256xf32> to vector<24x256xbf16>
    %cst_23 = arith.constant dense<0.000000e+00> : vector<16x256xf32>
    %76 = tpu.matmul %74, %75, %cst_23 {dimension_numbers = #tpu.dot_dimension_numbers<[1], [0], [0], [1], [0, 0, 1, 1], [], []>} : vector<16x24xbf16>, vector<24x256xbf16>, vector<16x256xf32> -> vector<16x256xf32>
    %c0_24 = arith.constant 0 : index
    %c0_25 = arith.constant 0 : index
    %77 = vector.load %arg4[%c0_24, %c0_25] : memref<16x1xf32, #tpu.memory_space<vmem>>, vector<16x1xf32>
    %78 = vector.broadcast %77 : vector<16x1xf32> to vector<16x256xf32>
    %79 = arith.addf %76, %78 : vector<16x256xf32>
    %cst_26 = arith.constant 0.000000e+00 : f32
    %80 = vector.broadcast %cst_26 : f32 to vector<16x256xf32>
    %81 = arith.maximumf %79, %80 : vector<16x256xf32>
    %82 = vector.shape_cast %81 : vector<16x256xf32> to vector<16x2x128xf32>
    %83 = arith.truncf %82 : vector<16x2x128xf32> to vector<16x2x128xbf16>
    %c0_27 = arith.constant 0 : index
    %c0_28 = arith.constant 0 : index
    %c0_29 = arith.constant 0 : index
    %84 = vector.load %arg5[%c0_27, %c0_28, %c0_29] : memref<16x16x128xbf16, #tpu.memory_space<vmem>>, vector<16x16x128xbf16>
    "tpu.trace_start"() <{level = 10 : i32, message = "cnw,cdw->cnd"}> : () -> ()
    %cst_30 = arith.constant dense<0.000000e+00> : vector<16x2x16xf32>
    %85 = tpu.matmul %83, %84, %cst_30 {dimension_numbers = #tpu.dot_dimension_numbers<[2], [2], [1], [1], [0, 0, 0, 1, 1, 1], [0], [0]>} : vector<16x2x128xbf16>, vector<16x16x128xbf16>, vector<16x2x16xf32> -> vector<16x2x16xf32>
    "tpu.trace_stop"() : () -> ()
    %cst_31 = arith.constant dense<0.000000e+00> : vector<2x16xf32>
    %86 = vector.multi_reduction <add>, %85, %cst_31 [0] : vector<16x2x16xf32> to vector<2x16xf32>
    %c0_32 = arith.constant 0 : index
    %c0_33 = arith.constant 0 : index
    %87 = vector.load %arg6[%c0_32, %c0_33] : memref<1x16xf32, #tpu.memory_space<vmem>>, vector<1x16xf32>
    %88 = vector.broadcast %87 : vector<1x16xf32> to vector<2x16xf32>
    %89 = arith.addf %86, %88 : vector<2x16xf32>
    %cst_34 = arith.constant 0.000000e+00 : f32
    %90 = vector.broadcast %cst_34 : f32 to vector<2x16xf32>
    %91 = arith.maximumf %89, %90 : vector<2x16xf32>
    %92 = arith.truncf %91 : vector<2x16xf32> to vector<2x16xbf16>
    %c0_35 = arith.constant 0 : index
    %c0_36 = arith.constant 0 : index
    %93 = vector.load %arg7[%c0_35, %c0_36] : memref<16x128xbf16, #tpu.memory_space<vmem>>, vector<16x128xbf16>
    %cst_37 = arith.constant dense<0.000000e+00> : vector<2x128xf32>
    %94 = tpu.matmul %92, %93, %cst_37 {dimension_numbers = #tpu.dot_dimension_numbers<[1], [0], [0], [1], [0, 0, 1, 1], [], []>} : vector<2x16xbf16>, vector<16x128xbf16>, vector<2x128xf32> -> vector<2x128xf32>
    %c0_38 = arith.constant 0 : index
    %c0_39 = arith.constant 0 : index
    %95 = vector.load %arg8[%c0_38, %c0_39] : memref<1x128xf32, #tpu.memory_space<vmem>>, vector<1x128xf32>
    %96 = vector.broadcast %95 : vector<1x128xf32> to vector<2x128xf32>
    %97 = arith.addf %94, %96 : vector<2x128xf32>
    %cst_40 = arith.constant 0.000000e+00 : f32
    %98 = vector.broadcast %cst_40 : f32 to vector<2x128xf32>
    %99 = arith.maximumf %97, %98 : vector<2x128xf32>
    %100 = vector.extract_strided_slice %99 {offsets = [0, 0], sizes = [1, 128], strides = [1, 1]} : vector<2x128xf32> to vector<1x128xf32>
    %101 = vector.extract_strided_slice %99 {offsets = [1, 0], sizes = [1, 128], strides = [1, 1]} : vector<2x128xf32> to vector<1x128xf32>
    %102 = tpu.concatenate %100, %101 in 1 : vector<1x128xf32>, vector<1x128xf32> -> vector<1x256xf32>
    %c-1_i32 = arith.constant -1 : i32
    %103 = vector.broadcast %c-1_i32 : i32 to vector<1x256xi32>
    %104 = arith.addi %17, %103 : vector<1x256xi32>
    %c0_i32_41 = arith.constant 0 : i32
    %105 = vector.broadcast %c0_i32_41 : i32 to vector<1x256xi32>
    %106 = arith.cmpi sge, %104, %105 : vector<1x256xi32>
    %c-1_i32_42 = arith.constant -1 : i32
    %107 = vector.broadcast %c-1_i32_42 : i32 to vector<1x256xi32>
    %108 = arith.addi %17, %107 : vector<1x256xi32>
    %c128_i32_43 = arith.constant 128 : i32
    %109 = vector.broadcast %c128_i32_43 : i32 to vector<1x256xi32>
    %110 = arith.cmpi slt, %108, %109 : vector<1x256xi32>
    %111 = arith.andi %106, %110 : vector<1x256xi1>
    %c1_i32_44 = arith.constant 1 : i32
    %112 = tpu.dynamic_rotate %102 by %c1_i32_44 dim 1 : vector<1x256xf32>, i32 -> vector<1x256xf32>
    %cst_45 = arith.constant 0.000000e+00 : f32
    %113 = vector.broadcast %cst_45 : f32 to vector<1x256xf32>
    %114 = arith.select %111, %112, %113 : vector<1x256xi1>, vector<1x256xf32>
    %c255_i32_46 = arith.constant 255 : i32
    %115 = tpu.dynamic_rotate %102 by %c255_i32_46 dim 1 : vector<1x256xf32>, i32 -> vector<1x256xf32>
    %cst_47 = arith.constant 0.000000e+00 : f32
    %116 = vector.broadcast %cst_47 : f32 to vector<1x256xf32>
    %117 = arith.select %26, %115, %116 : vector<1x256xi1>, vector<1x256xf32>
    %c0_48 = arith.constant 0 : index
    %c0_49 = arith.constant 0 : index
    %118 = vector.load %arg9[%c0_48, %c0_49] : memref<16x3xf32, #tpu.memory_space<vmem>>, vector<16x3xf32>
    %c0_50 = arith.constant 0 : index
    %c0_51 = arith.constant 0 : index
    %119 = vector.load %arg10[%c0_50, %c0_51] : memref<16x1xf32, #tpu.memory_space<vmem>>, vector<16x1xf32>
    %120 = vector.shape_cast %119 : vector<16x1xf32> to vector<16x1xf32>
    %121 = vector.broadcast %120 : vector<16x1xf32> to vector<16x256xf32>
    %122 = vector.extract_strided_slice %118 {offsets = [0, 0], sizes = [16, 1], strides = [1, 1]} : vector<16x3xf32> to vector<16x1xf32>
    %123 = vector.broadcast %122 : vector<16x1xf32> to vector<16x256xf32>
    %124 = vector.broadcast %114 : vector<1x256xf32> to vector<16x256xf32>
    %125 = arith.mulf %123, %124 : vector<16x256xf32>
    %126 = arith.addf %121, %125 : vector<16x256xf32>
    %127 = vector.extract_strided_slice %118 {offsets = [0, 1], sizes = [16, 1], strides = [1, 1]} : vector<16x3xf32> to vector<16x1xf32>
    %128 = vector.broadcast %127 : vector<16x1xf32> to vector<16x256xf32>
    %129 = vector.broadcast %102 : vector<1x256xf32> to vector<16x256xf32>
    %130 = arith.mulf %128, %129 : vector<16x256xf32>
    %131 = arith.addf %126, %130 : vector<16x256xf32>
    %132 = vector.extract_strided_slice %118 {offsets = [0, 2], sizes = [16, 1], strides = [1, 1]} : vector<16x3xf32> to vector<16x1xf32>
    %133 = vector.broadcast %132 : vector<16x1xf32> to vector<16x256xf32>
    %134 = vector.broadcast %117 : vector<1x256xf32> to vector<16x256xf32>
    %135 = arith.mulf %133, %134 : vector<16x256xf32>
    %136 = arith.addf %131, %135 : vector<16x256xf32>
    %cst_52 = arith.constant 0.000000e+00 : f32
    %137 = vector.broadcast %cst_52 : f32 to vector<16x256xf32>
    %138 = arith.maximumf %136, %137 : vector<16x256xf32>
    %c1_i32_53 = arith.constant 1 : i32
    %139 = tpu.dynamic_rotate %138 by %c1_i32_53 dim 1 : vector<16x256xf32>, i32 -> vector<16x256xf32>
    %cst_54 = arith.constant 0.000000e+00 : f32
    %140 = vector.shape_cast %111 : vector<1x256xi1> to vector<1x256xi1>
    %141 = vector.broadcast %140 : vector<1x256xi1> to vector<16x256xi1>
    %142 = vector.broadcast %cst_54 : f32 to vector<16x256xf32>
    %143 = arith.select %141, %139, %142 : vector<16x256xi1>, vector<16x256xf32>
    %c255_i32_55 = arith.constant 255 : i32
    %144 = tpu.dynamic_rotate %138 by %c255_i32_55 dim 1 : vector<16x256xf32>, i32 -> vector<16x256xf32>
    %cst_56 = arith.constant 0.000000e+00 : f32
    %145 = vector.shape_cast %26 : vector<1x256xi1> to vector<1x256xi1>
    %146 = vector.broadcast %145 : vector<1x256xi1> to vector<16x256xi1>
    %147 = vector.broadcast %cst_56 : f32 to vector<16x256xf32>
    %148 = arith.select %146, %144, %147 : vector<16x256xi1>, vector<16x256xf32>
    %149 = tpu.concatenate %143, %138, %148 in 0 : vector<16x256xf32>, vector<16x256xf32>, vector<16x256xf32> -> vector<48x256xf32>
    %c0_57 = arith.constant 0 : index
    %c0_58 = arith.constant 0 : index
    %150 = vector.load %arg11[%c0_57, %c0_58] : memref<8x48xbf16, #tpu.memory_space<vmem>>, vector<8x48xbf16>
    %151 = arith.truncf %149 : vector<48x256xf32> to vector<48x256xbf16>
    %cst_59 = arith.constant dense<0.000000e+00> : vector<8x256xf32>
    %152 = tpu.matmul %150, %151, %cst_59 {dimension_numbers = #tpu.dot_dimension_numbers<[1], [0], [0], [1], [0, 0, 1, 1], [], []>} : vector<8x48xbf16>, vector<48x256xbf16>, vector<8x256xf32> -> vector<8x256xf32>
    %c0_60 = arith.constant 0 : index
    %c0_61 = arith.constant 0 : index
    %153 = vector.load %arg12[%c0_60, %c0_61] : memref<8x1xf32, #tpu.memory_space<vmem>>, vector<8x1xf32>
    %154 = vector.broadcast %153 : vector<8x1xf32> to vector<8x256xf32>
    %155 = arith.addf %152, %154 : vector<8x256xf32>
    %cst_62 = arith.constant 0.000000e+00 : f32
    %156 = vector.broadcast %cst_62 : f32 to vector<8x256xf32>
    %157 = arith.maximumf %155, %156 : vector<8x256xf32>
    %c0_63 = arith.constant 0 : index
    %c0_64 = arith.constant 0 : index
    %158 = vector.load %arg13[%c0_63, %c0_64] : memref<1x8xbf16, #tpu.memory_space<vmem>>, vector<1x8xbf16>
    %159 = arith.truncf %157 : vector<8x256xf32> to vector<8x256xbf16>
    %cst_65 = arith.constant dense<0.000000e+00> : vector<1x256xf32>
    %160 = tpu.matmul %158, %159, %cst_65 {dimension_numbers = #tpu.dot_dimension_numbers<[1], [0], [0], [1], [0, 0, 1, 1], [], []>} : vector<1x8xbf16>, vector<8x256xbf16>, vector<1x256xf32> -> vector<1x256xf32>
    %c0_66 = arith.constant 0 : index
    %c0_67 = arith.constant 0 : index
    %161 = vector.load %arg14[%c0_66, %c0_67] : memref<1x1xf32, #tpu.memory_space<vmem>>, vector<1x1xf32>
    %162 = vector.broadcast %161 : vector<1x1xf32> to vector<1x256xf32>
    %163 = arith.addf %160, %162 : vector<1x256xf32>
    %c0_68 = arith.constant 0 : index
    %c0_69 = arith.constant 0 : index
    %164 = vector.load %arg15[%c0_68, %c0_69] : memref<1x256xf32, #tpu.memory_space<vmem>>, vector<1x256xf32>
    tpu.vector_store %arg15[%c0_68, %c0_69], %163 {strides = array<i32>} : memref<1x256xf32, #tpu.memory_space<vmem>>, vector<1x256xf32>,
    return
  }
}

</mosaic_0001>

<llo_original>
// kernel: _lambda_.1
$region0: #{_lambda_.1}
  #allocation0 [shape = 'u32[]', space=smem, size = 0x4, offset = 0x4, fixed_abs, tag = 'smem constant byte address 0x4 - core index']
  #allocation1 [shape = 'u32[144,128]{1,0:T(1,128)}', space=vmem, size = 0x12000, scoped, tag = 'internal scratch']
  #allocation2 [shape = 'f32[1,1]{1,0:T(1,128)S(1)}', space=vmem, size = 0x200, scoped, tag = 'scoped memory for _lambda_.1']
  %s0 = inlined_call_operand.hbm [shape: f32[1,256], index: 0, kind: input, shape index: {}]
  %s1 = inlined_call_operand.hbm [shape: f32[8,3], index: 1, kind: input, shape index: {}]
  %s2 = inlined_call_operand.hbm [shape: f32[8,1], index: 2, kind: input, shape index: {}]
  %s3 = inlined_call_operand.vmem [shape: bf16[16,24], index: 3, kind: input, shape index: {}]
  %s4 = inlined_call_operand.hbm [shape: f32[16,1], index: 4, kind: input, shape index: {}]
  %s5 = inlined_call_operand.hbm [shape: bf16[16,16,128], index: 5, kind: input, shape index: {}]
  %s6 = inlined_call_operand.hbm [shape: f32[1,16], index: 6, kind: input, shape index: {}]
  %s7 = inlined_call_operand.vmem [shape: bf16[16,128], index: 7, kind: input, shape index: {}]
  %s8 = inlined_call_operand.hbm [shape: f32[1,128], index: 8, kind: input, shape index: {}]
  %s9 = inlined_call_operand.vmem [shape: f32[16,3], index: 9, kind: input, shape index: {}]
  %s10 = inlined_call_operand.vmem [shape: f32[16,1], index: 10, kind: input, shape index: {}]
  %s11 = inlined_call_operand.hbm [shape: bf16[8,48], index: 11, kind: input, shape index: {}]
  %s12 = inlined_call_operand.hbm [shape: f32[8,1], index: 12, kind: input, shape index: {}]
  %s13 = inlined_call_operand.vmem [shape: bf16[1,8], index: 13, kind: input, shape index: {}]
  %s14 = inlined_call_operand.<no memory space> [shape: f32[1,1], index: 14, kind: input, shape index: {}]
  %s15 = inlined_call_operand.hbm [shape: f32[1,256], index: 15, kind: output, shape index: {}]
  %s16 = sld [smem:[#allocation0]]
  $region106: #{_lambda_.1} parent=0
    _
  %s18 = ssub.s32 1, %s16
  %s19 = scalar_select 0, %s18, %s16
  %v20 = vstv %s14
  %21 = vst [vmem:[#allocation2] sm:$0x1] %v20
  $region1: #{_lambda_.1} parent=0
    #allocation3 [shape = 'u8[1024]{0}', space=vmem, size = 0x400, scoped, tag = 'input window, operand 0, single buffered']
    #allocation4 [shape = 's32[1]{0}', space=sflag, size = 0x4, scoped, tag = 'scoped memory for _lambda_.1']
    #allocation5 [shape = 's32[1]{0}', space=sflag, size = 0x4, scoped, tag = 'scoped memory for _lambda_.1']
    #allocation6 [shape = 'u8[4096]{0}', space=vmem, size = 0x1000, scoped, tag = 'input window, operand 1, single buffered']
    #allocation7 [shape = 's32[1]{0}', space=sflag, size = 0x4, scoped, tag = 'scoped memory for _lambda_.1']
    #allocation8 [shape = 'u8[4096]{0}', space=vmem, size = 0x1000, scoped, tag = 'input window, operand 2, single buffered']
    #allocation9 [shape = 'u8[8192]{0}', space=vmem, size = 0x2000, scoped, tag = 'input window, operand 4, single buffered']
    #allocation10 [shape = 's32[1]{0}', space=sflag, size = 0x4, scoped, tag = 'scoped memory for _lambda_.1']
    #allocation11 [shape = 'u8[65536]{0}', space=vmem, size = 0x10000, scoped, tag = 'input window, operand 5, single buffered']
    #allocation12 [shape = 'u8[512]{0}', space=vmem, size = 0x400, scoped, tag = 'input window, operand 6, single buffered']
    #allocation13 [shape = 's32[1]{0}', space=sflag, size = 0x4, scoped, tag = 'scoped memory for _lambda_.1']
    #allocation14 [shape = 'u8[512]{0}', space=vmem, size = 0x400, scoped, tag = 'input window, operand 8, single buffered']
    #allocation15 [shape = 'u8[2048]{0}', space=vmem, size = 0x800, scoped, tag = 'input window, operand 11, single buffered']
    #allocation16 [shape = 's32[1]{0}', space=sflag, size = 0x4, scoped, tag = 'scoped memory for _lambda_.1']
    #allocation17 [shape = 'u8[4096]{0}', space=vmem, size = 0x1000, scoped, tag = 'input window, operand 12, single buffered']
    #allocation18 [shape = 'u8[1024]{0}', space=vmem, size = 0x400, scoped, tag = 'output window, operand 0, single buffered']
    %22 = vsyncpa [#allocation4], 0
    %23 = vsyncpa [#allocation7], 0
    %24 = vsyncpa [#allocation10], 0
    %25 = vsyncpa [#allocation13], 0
    %26 = vsyncpa [#allocation16], 0
    %27 = vsyncpa [#allocation5], 0
    // Predicated region
    $region2: #{_lambda_.1} parent=1 // pred_check
      _
    $region3: #{_lambda_.1} parent=1 // pred_check_branch
      %29 = sbr.rel (0) target = $region5
    $region4: #{_lambda_.1} parent=1 // pred_region
      %s31 = ssub.s32 32, 32
      %32 = vsyncadd [#allocation4], %s31
      %s34 = sshll.u32 [#allocation3], 4
      %s35 = int_to_ptr.vmem [resolvable:$true] %s34
      %37 = dma.hbm_to_vmem [thread:$0]  %s0, 32, %s35, [#allocation4]
    $region5: #{_lambda_.1} parent=1 // pred_fallthru
      _
    // Predicated region
    $region6: #{_lambda_.1} parent=1 // pred_check
      _
    $region7: #{_lambda_.1} parent=1 // pred_check_branch
      %39 = sbr.rel (0) target = $region9
    $region8: #{_lambda_.1} parent=1 // pred_region
      %s41 = ssub.s32 128, 128
      %42 = vsyncadd [#allocation7], %s41
      %s44 = sshll.u32 [#allocation6], 4
      %s45 = int_to_ptr.vmem [resolvable:$true] %s44
      %47 = dma.hbm_to_vmem [thread:$0]  %s1, 128, %s45, [#allocation7]
    $region9: #{_lambda_.1} parent=1 // pred_fallthru
      _
    // Predicated region
    $region10: #{_lambda_.1} parent=1 // pred_check
      _
    $region11: #{_lambda_.1} parent=1 // pred_check_branch
      %49 = sbr.rel (0) target = $region13
    $region12: #{_lambda_.1} parent=1 // pred_region
      %s51 = ssub.s32 128, 128
      %52 = vsyncadd [#allocation7], %s51
      %s54 = sshll.u32 [#allocation8], 4
      %s55 = int_to_ptr.vmem [resolvable:$true] %s54
      %57 = dma.hbm_to_vmem [thread:$0]  %s2, 128, %s55, [#allocation7]
    $region13: #{_lambda_.1} parent=1 // pred_fallthru
      _
    // Predicated region
    $region14: #{_lambda_.1} parent=1 // pred_check
      _
    $region15: #{_lambda_.1} parent=1 // pred_check_branch
      %59 = sbr.rel (0) target = $region17
    $region16: #{_lambda_.1} parent=1 // pred_region
      _
    $region17: #{_lambda_.1} parent=1 // pred_fallthru
      _
    // Predicated region
    $region18: #{_lambda_.1} parent=1 // pred_check
      _
    $region19: #{_lambda_.1} parent=1 // pred_check_branch
      %61 = sbr.rel (0) target = $region21
    $region20: #{_lambda_.1} parent=1 // pred_region
      %s63 = ssub.s32 256, 256
      %64 = vsyncadd [#allocation10], %s63
      %s65 = sshll.u32 [#allocation9], 4
      %s66 = int_to_ptr.vmem [resolvable:$true] %s65
      %71 = dma.hbm_to_vmem [thread:$0]  %s4, 256, %s66, [#allocation10], 128, 128, 8
    $region21: #{_lambda_.1} parent=1 // pred_fallthru
      _
    // Predicated region
    $region22: #{_lambda_.1} parent=1 // pred_check
      _
    $region23: #{_lambda_.1} parent=1 // pred_check_branch
      %73 = sbr.rel (0) target = $region25
    $region24: #{_lambda_.1} parent=1 // pred_region
      %s75 = ssub.s32 2048, 2048
      %76 = vsyncadd [#allocation10], %s75
      %s77 = sshll.u32 [#allocation11], 4
      %s78 = int_to_ptr.vmem [resolvable:$true] %s77
      %83 = dma.hbm_to_vmem [thread:$0]  %s5, 2048, %s78, [#allocation10], 64, 64, 4
    $region25: #{_lambda_.1} parent=1 // pred_fallthru
      _
    // Predicated region
    $region26: #{_lambda_.1} parent=1 // pred_check
      _
    $region27: #{_lambda_.1} parent=1 // pred_check_branch
      %85 = sbr.rel (0) target = $region29
    $region28: #{_lambda_.1} parent=1 // pred_region
      %s87 = ssub.s32 16, 16
      %88 = vsyncadd [#allocation13], %s87
      %s90 = sshll.u32 [#allocation12], 4
      %s91 = int_to_ptr.vmem [resolvable:$true] %s90
      %93 = dma.hbm_to_vmem [thread:$0]  %s6, 16, %s91, [#allocation13]
    $region29: #{_lambda_.1} parent=1 // pred_fallthru
      _
    // Predicated region
    $region30: #{_lambda_.1} parent=1 // pred_check
      _
    $region31: #{_lambda_.1} parent=1 // pred_check_branch
      %95 = sbr.rel (0) target = $region33
    $region32: #{_lambda_.1} parent=1 // pred_region
      _
    $region33: #{_lambda_.1} parent=1 // pred_fallthru
      _
    // Predicated region
    $region34: #{_lambda_.1} parent=1 // pred_check
      _
    $region35: #{_lambda_.1} parent=1 // pred_check_branch
      %97 = sbr.rel (0) target = $region37
    $region36: #{_lambda_.1} parent=1 // pred_region
      %s99 = ssub.s32 16, 16
      %100 = vsyncadd [#allocation13], %s99
      %s102 = sshll.u32 [#allocation14], 4
      %s103 = int_to_ptr.vmem [resolvable:$true] %s102
      %105 = dma.hbm_to_vmem [thread:$0]  %s8, 16, %s103, [#allocation13]
    $region37: #{_lambda_.1} parent=1 // pred_fallthru
      _
    // Predicated region
    $region38: #{_lambda_.1} parent=1 // pred_check
      _
    $region39: #{_lambda_.1} parent=1 // pred_check_branch
      %107 = sbr.rel (0) target = $region41
    $region40: #{_lambda_.1} parent=1 // pred_region
      _
    $region41: #{_lambda_.1} parent=1 // pred_fallthru
      _
    // Predicated region
    $region42: #{_lambda_.1} parent=1 // pred_check
      _
    $region43: #{_lambda_.1} parent=1 // pred_check_branch
      %109 = sbr.rel (0) target = $region45
    $region44: #{_lambda_.1} parent=1 // pred_region
      _
    $region45: #{_lambda_.1} parent=1 // pred_fallthru
      _
    // Predicated region
    $region46: #{_lambda_.1} parent=1 // pred_check
      _
    $region47: #{_lambda_.1} parent=1 // pred_check_branch
      %111 = sbr.rel (0) target = $region49
    $region48: #{_lambda_.1} parent=1 // pred_region
      %s113 = ssub.s32 64, 64
      %114 = vsyncadd [#allocation16], %s113
      %s116 = sshll.u32 [#allocation15], 4
      %s117 = int_to_ptr.vmem [resolvable:$true] %s116
      %119 = dma.hbm_to_vmem [thread:$0]  %s11, 64, %s117, [#allocation16]
    $region49: #{_lambda_.1} parent=1 // pred_fallthru
      _
    // Predicated region
    $region50: #{_lambda_.1} parent=1 // pred_check
      _
    $region51: #{_lambda_.1} parent=1 // pred_check_branch
      %121 = sbr.rel (0) target = $region53
    $region52: #{_lambda_.1} parent=1 // pred_region
      %s123 = ssub.s32 128, 128
      %124 = vsyncadd [#allocation16], %s123
      %s126 = sshll.u32 [#allocation17], 4
      %s127 = int_to_ptr.vmem [resolvable:$true] %s126
      %129 = dma.hbm_to_vmem [thread:$0]  %s12, 128, %s127, [#allocation16]
    $region53: #{_lambda_.1} parent=1 // pred_fallthru
      _
    // Predicated region
    $region54: #{_lambda_.1} parent=1 // pred_check
      _
    $region55: #{_lambda_.1} parent=1 // pred_check_branch
      %131 = sbr.rel (0) target = $region57
    $region56: #{_lambda_.1} parent=1 // pred_region
      _
    $region57: #{_lambda_.1} parent=1 // pred_fallthru
      _
    // Predicated region
    $region58: #{_lambda_.1} parent=1 // pred_check
      _
    $region59: #{_lambda_.1} parent=1 // pred_check_branch
      %133 = sbr.rel (0) target = $region61
    $region60: #{_lambda_.1} parent=1 // pred_region
      _
    $region61: #{_lambda_.1} parent=1 // pred_fallthru
      _
    // Predicated region
    $region62: #{_lambda_.1} parent=1 // pred_check
      _
    $region63: #{_lambda_.1} parent=1 // pred_check_branch
      %135 = sbr.rel (0) target = $region65
    $region64: #{_lambda_.1} parent=1 // pred_region
      %136 = dma.done [#allocation4], 32
    $region65: #{_lambda_.1} parent=1 // pred_fallthru
      _
    // Predicated region
    $region66: #{_lambda_.1} parent=1 // pred_check
      _
    $region67: #{_lambda_.1} parent=1 // pred_check_branch
      %138 = sbr.rel (0) target = $region69
    $region68: #{_lambda_.1} parent=1 // pred_region
      %139 = dma.done [#allocation7], 128
    $region69: #{_lambda_.1} parent=1 // pred_fallthru
      _
    // Predicated region
    $region70: #{_lambda_.1} parent=1 // pred_check
      _
    $region71: #{_lambda_.1} parent=1 // pred_check_branch
      %141 = sbr.rel (0) target = $region73
    $region72: #{_lambda_.1} parent=1 // pred_region
      %142 = dma.done [#allocation7], 128
    $region73: #{_lambda_.1} parent=1 // pred_fallthru
      _
    // Predicated region
    $region74: #{_lambda_.1} parent=1 // pred_check
      _
    $region75: #{_lambda_.1} parent=1 // pred_check_branch
      %144 = sbr.rel (0) target = $region77
    $region76: #{_lambda_.1} parent=1 // pred_region
      %145 = dma.done [#allocation10], 256
    $region77: #{_lambda_.1} parent=1 // pred_fallthru
      _
    // Predicated region
    $region78: #{_lambda_.1} parent=1 // pred_check
      _
    $region79: #{_lambda_.1} parent=1 // pred_check_branch
      %147 = sbr.rel (0) target = $region81
    $region80: #{_lambda_.1} parent=1 // pred_region
      %148 = dma.done [#allocation10], 2048
    $region81: #{_lambda_.1} parent=1 // pred_fallthru
      _
    // Predicated region
    $region82: #{_lambda_.1} parent=1 // pred_check
      _
    $region83: #{_lambda_.1} parent=1 // pred_check_branch
      %150 = sbr.rel (0) target = $region85
    $region84: #{_lambda_.1} parent=1 // pred_region
      %151 = dma.done [#allocation13], 16
    $region85: #{_lambda_.1} parent=1 // pred_fallthru
      _
    // Predicated region
    $region86: #{_lambda_.1} parent=1 // pred_check
      _
    $region87: #{_lambda_.1} parent=1 // pred_check_branch
      %153 = sbr.rel (0) target = $region89
    $region88: #{_lambda_.1} parent=1 // pred_region
      %154 = dma.done [#allocation13], 16
    $region89: #{_lambda_.1} parent=1 // pred_fallthru
      _
    // Predicated region
    $region90: #{_lambda_.1} parent=1 // pred_check
      _
    $region91: #{_lambda_.1} parent=1 // pred_check_branch
      %156 = sbr.rel (0) target = $region93
    $region92: #{_lambda_.1} parent=1 // pred_region
      %157 = dma.done [#allocation16], 64
    $region93: #{_lambda_.1} parent=1 // pred_fallthru
      _
    // Predicated region
    $region94: #{_lambda_.1} parent=1 // pred_check
      _
    $region95: #{_lambda_.1} parent=1 // pred_check_branch
      %159 = sbr.rel (0) target = $region97
    $region96: #{_lambda_.1} parent=1 // pred_region
      %160 = dma.done [#allocation16], 128
    $region97: #{_lambda_.1} parent=1 // pred_fallthru
      _
    %v162 = vld [vmem:[#allocation3] sm:$0x3]
    %v163 = vlaneseq
    %v164 = vand.u32 %v163, 127
    %v165 = vadd.s32 %v164, 128
    %vm166 = vcmp.lt.s32.totalorder %v164, 0
    %v167 = vsub.s32 0, %v164
    %v168 = vsel %vm166, %v167, %v164
    %v169 = vshrl.u32 %v168, 7
    %v170 = vand.u32 %v168, 127
    %v171 = vsub.s32 0, %v170
    %v172 = vsel %vm166, %v171, %v170
    %vm173 = vcmp.lt.s32.totalorder %v165, 0
    %v174 = vsub.s32 0, %v165
    %v175 = vsel %vm173, %v174, %v165
    %v176 = vshrl.u32 %v175, 7
    %v177 = vand.u32 %v175, 127
    %v178 = vsub.s32 0, %v177
    %v179 = vsel %vm173, %v178, %v177
    %vm180 = vcmp.ne.s32.totalorder %v172, 0
    %vm181 = vcmp.ne.s32.totalorder %v179, 0
    %vm182 = vcmp.lt.s32.totalorder %v172, 0
    %vm183 = vcmp.lt.s32.totalorder %v179, 0
    %vm184 = vmand %vm182, %vm180
    %vm185 = vmand %vm183, %vm181
    %v186 = vadd.s32 %v172, 128
    %v187 = vadd.s32 %v179, 128
    %v188 = vsel %vm184, %v186, %v172
    %v189 = vsel %vm185, %v187, %v179
    %v190 = vadd.s32 %v188, 1
    %v191 = vadd.s32 %v189, 1
    %vm192 = vcmp.ge.s32.totalorder %v190, 0
    %vm193 = vcmp.ge.s32.totalorder %v191, 0
    %vm194 = vcmp.lt.s32.totalorder %v190, 128
    %vm195 = vcmp.lt.s32.totalorder %v191, 128
    %vm196 = vmand %vm192, %vm194
    %vm197 = vmand %vm193, %vm195
    %v199 = vlaneseq
    %v200 = vshrl.u32 %v199, 7
    %v201 = vsub.s32 0, %v200
    %v202 = vrot.slane %v162, %v201
    %v203 = vlaneseq
    %v204 = vshrl.u32 %v203, 7
    %v205 = vsub.s32 1, %v204
    %v206 = vrot.slane %v162, %v205
    %209 = vrot.lane.b32.xlu0 %v202, 127
    %v210 = vpop.permute.xlu0 %209
    %211 = vrot.lane.b32.xlu0 %v206, 127
    %v212 = vpop.permute.xlu0 %211
    %vm213 = vcmp.lt.s32.totalorder %v164, 127
    %v214 = vsel %vm213, %v210, %v212
    %v215 = vsel %vm213, %v212, %v210
    %v216 = vsel %vm196, %v214, 0.0
    %v217 = vsel %vm197, %v215, 0.0
    %v218 = vadd.s32 %v188, 2
    %v219 = vadd.s32 %v189, 2
    %vm220 = vcmp.ge.s32.totalorder %v218, 0
    %vm221 = vcmp.ge.s32.totalorder %v219, 0
    %vm222 = vcmp.lt.s32.totalorder %v218, 128
    %vm223 = vcmp.lt.s32.totalorder %v219, 128
    %vm224 = vmand %vm220, %vm222
    %vm225 = vmand %vm221, %vm223
    %226 = vrot.lane.b32.xlu0 %v202, 126
    %v227 = vpop.permute.xlu0 %226
    %228 = vrot.lane.b32.xlu0 %v206, 126
    %v229 = vpop.permute.xlu0 %228
    %vm230 = vcmp.lt.s32.totalorder %v164, 126
    %v231 = vsel %vm230, %v227, %v229
    %v232 = vsel %vm230, %v229, %v227
    %v233 = vsel %vm224, %v231, 0.0
    %v234 = vsel %vm225, %v232, 0.0
    %v235 = vld [vmem:[#allocation6] sm:$0xff]
    %v236 = vld [vmem:[#allocation8] sm:$0xff]
    %238 = vset.pattern.permute.xlu0 0
    %239 = vperm.xlu0 %238, %v236
    %v240 = vpop.permute.xlu0 %239
    %243 = vset.pattern.permute.xlu0 0
    %244 = vperm.xlu0 %243, %v235
    %v245 = vpop.permute.xlu0 %244
    %v247 = vmul.f32 %v245, %v202
    %v248 = vmul.f32 %v245, %v206
    %v249 = vadd.f32 %v240, %v247
    %v250 = vadd.f32 %v240, %v248
    %251 = vset.pattern.permute.xlu0 1
    %252 = vperm.xlu0 %251, %v235
    %v253 = vpop.permute.xlu0 %252
    %v255 = vlaneseq
    %v256 = vshrl.u32 %v255, 7
    %v257 = vsub.s32 0, %v256
    %v258 = vrot.slane %v216, %v257
    %v259 = vlaneseq
    %v260 = vshrl.u32 %v259, 7
    %v261 = vsub.s32 0, %v260
    %v262 = vrot.slane %v217, %v261
    %v263 = vmul.f32 %v253, %v258
    %v264 = vmul.f32 %v253, %v262
    %v265 = vadd.f32 %v249, %v263
    %v266 = vadd.f32 %v250, %v264
    %267 = vset.pattern.permute.xlu0 2
    %268 = vperm.xlu0 %267, %v235
    %v269 = vpop.permute.xlu0 %268
    %v271 = vlaneseq
    %v272 = vshrl.u32 %v271, 7
    %v273 = vsub.s32 0, %v272
    %v274 = vrot.slane %v233, %v273
    %v275 = vlaneseq
    %v276 = vshrl.u32 %v275, 7
    %v277 = vsub.s32 0, %v276
    %v278 = vrot.slane %v234, %v277
    %v279 = vmul.f32 %v269, %v274
    %v280 = vmul.f32 %v269, %v278
    %v281 = vadd.f32 %v265, %v279
    %v282 = vadd.f32 %v266, %v280
    %v283 = vmax.f32 %v281, 0.0
    %v284 = vmax.f32 %v282, 0.0
    %285 = vrot.lane.b32.xlu0 %v283, 127
    %v286 = vpop.permute.xlu0 %285
    %287 = vrot.lane.b32.xlu0 %v284, 127
    %v288 = vpop.permute.xlu0 %287
    %v289 = vsel %vm213, %v286, %v288
    %v290 = vsel %vm213, %v288, %v286
    %v291 = vsel %vm196, 1, 0
    %v292 = vsel %vm197, 1, 0
    %vm293 = vcmp.eq.s32.totalorder %v291, 1
    %vm294 = vcmp.eq.s32.totalorder %v292, 1
    %v295 = vsel %vm293, %v289, 0.0
    %v296 = vsel %vm294, %v290, 0.0
    %297 = vrot.lane.b32.xlu0 %v283, 126
    %v298 = vpop.permute.xlu0 %297
    %299 = vrot.lane.b32.xlu0 %v284, 126
    %v300 = vpop.permute.xlu0 %299
    %v301 = vsel %vm230, %v298, %v300
    %v302 = vsel %vm230, %v300, %v298
    %v303 = vsel %vm224, 1, 0
    %v304 = vsel %vm225, 1, 0
    %vm305 = vcmp.eq.s32.totalorder %v303, 1
    %vm306 = vcmp.eq.s32.totalorder %v304, 1
    %v307 = vsel %vm305, %v301, 0.0
    %v308 = vsel %vm306, %v302, 0.0
    %v309 = vld [vmem:[%s3] sm:$0xf]
    %v310 = vld [vmem:[%s3 + $0x4] sm:$0xf]
    %v311 = vpack.c.bf16 %v295, %v283
    %v312 = vpack.c.bf16 %v296, %v284
    %v313 = vpack.c.bf16 %v307, %v307
    %v314 = vpack.c.bf16 %v308, %v308
    %v315 = vld [vmem:[#allocation9] sm:$0xff]
    %v316 = vld [vmem:[#allocation9 + $0x8] sm:$0xff]
    %318 = vset.pattern.permute.xlu0 0
    %319 = vperm.xlu0 %318, %v315
    %v320 = vpop.permute.xlu0 %319
    %323 = vset.pattern.permute.xlu0 0
    %324 = vperm.xlu0 %323, %v316
    %v325 = vpop.permute.xlu0 %324
    %v329 = vunpack.c.l.b16 %v309
    %v330 = vunpack.c.l.b16 %v310
    %v331 = vpack.c.b16 %v330, %v329
    %vm332 = vcmask 195584
    %v334 = vsel %vm332, %v331, 0
    %vm336 = vcmask 1043456
    %v338 = vsel %vm336, %v313, 0
    %v341 = vsel %vm336, %v314, 0
    %343 = vmatprep.subr.bf16.mxu0 %v312
    %344 = vmatpush1.bf16.msra.mxu0 %v311
    %345 = vmatprep.subr.bf16.mxu0 %v341
    %346 = vmatpush1.bf16.msra.mxu0 %v338
    %347 = vmatprep.subr.bf16.mxu0 0
    %348 = vmatpush1.bf16.msra.mxu0 0
    %349 = vmatprep.subr.bf16.mxu0 0
    %350 = vmatpush1.bf16.msra.mxu0 0
    %351 = vmatprep.subr.bf16.mxu0 0
    %352 = vmatpush1.bf16.msra.mxu0 0
    %353 = vmatprep.subr.bf16.mxu0 0
    %354 = vmatpush1.bf16.msra.mxu0 0
    %355 = vmatprep.subr.bf16.mxu0 0
    %356 = vmatpush1.bf16.msra.mxu0 0
    %357 = vmatprep.subr.bf16.mxu0 0
    %358 = vmatpush1.bf16.msra.mxu0 0
    %359 = vmatprep.subr.bf16.mxu0 0
    %360 = vmatpush1.bf16.msra.mxu0 0
    %361 = vmatprep.subr.bf16.mxu0 0
    %362 = vmatpush1.bf16.msra.mxu0 0
    %363 = vmatprep.subr.bf16.mxu0 0
    %364 = vmatpush1.bf16.msra.mxu0 0
    %365 = vmatprep.subr.bf16.mxu0 0
    %366 = vmatpush1.bf16.msra.mxu0 0
    %367 = vmatprep.subr.bf16.mxu0 0
    %368 = vmatpush1.bf16.msra.mxu0 0
    %369 = vmatprep.subr.bf16.mxu0 0
    %370 = vmatpush1.bf16.msra.mxu0 0
    %371 = vmatprep.subr.bf16.mxu0 0
    %372 = vmatpush1.bf16.msra.mxu0 0
    %373 = vmatprep.subr.bf16.mxu0 0
    %374 = vmatpush1.bf16.msra.mxu0 0
    %375 = vmatprep.mubr.bf16.mxu0 0
    %376 = vmatmul.mubr.bf16.gmra.mrb[0].mxu0 %v334
    %v377 = vpop.f32.mrb[0].mxu0
    %v378 = vadd.f32 %v320, %v377
    %v379 = vpop.f32.mrb[0].mxu0
    %v380 = vadd.f32 %v320, %v379
    %v381 = vpop.f32.mrb[0].mxu0
    %v382 = vadd.f32 %v325, %v381
    %v383 = vpop.f32.mrb[0].mxu0
    %v384 = vadd.f32 %v325, %v383
    %385 = vdwg.mxu0
    %v386 = vmax.f32 %v378, 0.0
    %v387 = vmax.f32 %v380, 0.0
    %v388 = vmax.f32 %v382, 0.0
    %v389 = vmax.f32 %v384, 0.0
    %v390 = vcombine.high %v386, 0.0
    %v392 = vunpack.c.l.s4 1983009808
    %v393 = vunpack.c.0.s8 %v392
    %v394 = vlaneseq
    %v395 = vshrl.u32 %v394, 7
    %v396 = vsub.s32 %v393, %v395
    %v397 = vrot.slane %v386, %v396
    %v399 = vunpack.c.l.s4 1983009808
    %v400 = vunpack.c.0.s8 %v399
    %v401 = vlaneseq
    %v402 = vshrl.u32 %v401, 7
    %v403 = vsub.s32 %v400, %v402
    %v404 = vrot.slane %v390, %v403
    %v405 = vcombine.high %v387, 0.0
    %v407 = vunpack.c.l.s4 1983009808
    %v408 = vunpack.c.0.s8 %v407
    %v409 = vlaneseq
    %v410 = vshrl.u32 %v409, 7
    %v411 = vsub.s32 %v408, %v410
    %v412 = vrot.slane %v387, %v411
    %v414 = vunpack.c.l.s4 1983009808
    %v415 = vunpack.c.0.s8 %v414
    %v416 = vlaneseq
    %v417 = vshrl.u32 %v416, 7
    %v418 = vsub.s32 %v415, %v417
    %v419 = vrot.slane %v405, %v418
    %v420 = vcombine.low %v397, %v412
    %v421 = vcombine.high %v397, %v412
    %v423 = vunpack.c.l.s4 1934713408
    %v424 = vunpack.c.0.s8 %v423
    %v425 = vlaneseq
    %v426 = vshrl.u32 %v425, 7
    %v427 = vsub.s32 %v424, %v426
    %v428 = vrot.slane %v420, %v427
    %v430 = vunpack.c.l.s4 1934713408
    %v431 = vunpack.c.0.s8 %v430
    %v432 = vlaneseq
    %v433 = vshrl.u32 %v432, 7
    %v434 = vsub.s32 %v431, %v433
    %v435 = vrot.slane %v421, %v434
    %v436 = vcombine.low %v404, %v419
    %v437 = vcombine.high %v404, %v419
    %v439 = vunpack.c.l.s4 1934713408
    %v440 = vunpack.c.0.s8 %v439
    %v441 = vlaneseq
    %v442 = vshrl.u32 %v441, 7
    %v443 = vsub.s32 %v440, %v442
    %v444 = vrot.slane %v436, %v443
    %v446 = vunpack.c.l.s4 1934713408
    %v447 = vunpack.c.0.s8 %v446
    %v448 = vlaneseq
    %v449 = vshrl.u32 %v448, 7
    %v450 = vsub.s32 %v447, %v449
    %v451 = vrot.slane %v437, %v450
    %v452 = vcombine.high %v428, 0.0
    %v453 = vcombine.high %v435, 0.0
    %v454 = vcombine.high %v444, 0.0
    %v455 = vcombine.high %v451, 0.0
    %v456 = vcombine.high %v388, 0.0
    %v458 = vunpack.c.l.s4 1983009808
    %v459 = vunpack.c.0.s8 %v458
    %v460 = vlaneseq
    %v461 = vshrl.u32 %v460, 7
    %v462 = vsub.s32 %v459, %v461
    %v463 = vrot.slane %v388, %v462
    %v465 = vunpack.c.l.s4 1983009808
    %v466 = vunpack.c.0.s8 %v465
    %v467 = vlaneseq
    %v468 = vshrl.u32 %v467, 7
    %v469 = vsub.s32 %v466, %v468
    %v470 = vrot.slane %v456, %v469
    %v471 = vcombine.high %v389, 0.0
    %v473 = vunpack.c.l.s4 1983009808
    %v474 = vunpack.c.0.s8 %v473
    %v475 = vlaneseq
    %v476 = vshrl.u32 %v475, 7
    %v477 = vsub.s32 %v474, %v476
    %v478 = vrot.slane %v389, %v477
    %v480 = vunpack.c.l.s4 1983009808
    %v481 = vunpack.c.0.s8 %v480
    %v482 = vlaneseq
    %v483 = vshrl.u32 %v482, 7
    %v484 = vsub.s32 %v481, %v483
    %v485 = vrot.slane %v471, %v484
    %v486 = vcombine.low %v463, %v478
    %v487 = vcombine.high %v463, %v478
    %v489 = vunpack.c.l.s4 1934713408
    %v490 = vunpack.c.0.s8 %v489
    %v491 = vlaneseq
    %v492 = vshrl.u32 %v491, 7
    %v493 = vsub.s32 %v490, %v492
    %v494 = vrot.slane %v486, %v493
    %v496 = vunpack.c.l.s4 1934713408
    %v497 = vunpack.c.0.s8 %v496
    %v498 = vlaneseq
    %v499 = vshrl.u32 %v498, 7
    %v500 = vsub.s32 %v497, %v499
    %v501 = vrot.slane %v487, %v500
    %v502 = vcombine.low %v470, %v485
    %v503 = vcombine.high %v470, %v485
    %v505 = vunpack.c.l.s4 1934713408
    %v506 = vunpack.c.0.s8 %v505
    %v507 = vlaneseq
    %v508 = vshrl.u32 %v507, 7
    %v509 = vsub.s32 %v506, %v508
    %v510 = vrot.slane %v502, %v509
    %v512 = vunpack.c.l.s4 1934713408
    %v513 = vunpack.c.0.s8 %v512
    %v514 = vlaneseq
    %v515 = vshrl.u32 %v514, 7
    %v516 = vsub.s32 %v513, %v515
    %v517 = vrot.slane %v503, %v516
    %v518 = vcombine.high %v494, 0.0
    %v519 = vcombine.high %v501, 0.0
    %v520 = vcombine.high %v510, 0.0
    %v521 = vcombine.high %v517, 0.0
    %v522 = vpack.c.bf16 %v428, %v428
    %v523 = vpack.c.bf16 %v452, %v452
    %v524 = vpack.c.bf16 %v435, %v435
    %v525 = vpack.c.bf16 %v453, %v453
    %v526 = vpack.c.bf16 %v444, %v444
    %v527 = vpack.c.bf16 %v454, %v454
    %v528 = vpack.c.bf16 %v451, %v451
    %v529 = vpack.c.bf16 %v455, %v455
    %v530 = vpack.c.bf16 %v494, %v494
    %v531 = vpack.c.bf16 %v518, %v518
    %v532 = vpack.c.bf16 %v501, %v501
    %v533 = vpack.c.bf16 %v519, %v519
    %v534 = vpack.c.bf16 %v510, %v510
    %v535 = vpack.c.bf16 %v520, %v520
    %v536 = vpack.c.bf16 %v517, %v517
    %v537 = vpack.c.bf16 %v521, %v521
    %v538 = vld [vmem:[#allocation11] sm:$0xf]
    %v539 = vld [vmem:[#allocation11 + $0x4] sm:$0xf]
    %v540 = vld [vmem:[#allocation11 + $0x8] sm:$0xf]
    %v541 = vld [vmem:[#allocation11 + $0xc] sm:$0xf]
    %v542 = vld [vmem:[#allocation11 + $0x10] sm:$0xf]
    %v543 = vld [vmem:[#allocation11 + $0x14] sm:$0xf]
    %v544 = vld [vmem:[#allocation11 + $0x18] sm:$0xf]
    %v545 = vld [vmem:[#allocation11 + $0x1c] sm:$0xf]
    %v546 = vld [vmem:[#allocation11 + $0x20] sm:$0xf]
    %v547 = vld [vmem:[#allocation11 + $0x24] sm:$0xf]
    %v548 = vld [vmem:[#allocation11 + $0x28] sm:$0xf]
    %v549 = vld [vmem:[#allocation11 + $0x2c] sm:$0xf]
    %v550 = vld [vmem:[#allocation11 + $0x30] sm:$0xf]
    %v551 = vld [vmem:[#allocation11 + $0x34] sm:$0xf]
    %v552 = vld [vmem:[#allocation11 + $0x38] sm:$0xf]
    %v553 = vld [vmem:[#allocation11 + $0x3c] sm:$0xf]
    %v554 = vld [vmem:[#allocation11 + $0x40] sm:$0xf]
    %v555 = vld [vmem:[#allocation11 + $0x44] sm:$0xf]
    %v556 = vld [vmem:[#allocation11 + $0x48] sm:$0xf]
    %v557 = vld [vmem:[#allocation11 + $0x4c] sm:$0xf]
    %v558 = vld [vmem:[#allocation11 + $0x50] sm:$0xf]
    %v559 = vld [vmem:[#allocation11 + $0x54] sm:$0xf]
    %v560 = vld [vmem:[#allocation11 + $0x58] sm:$0xf]
    %v561 = vld [vmem:[#allocation11 + $0x5c] sm:$0xf]
    %v562 = vld [vmem:[#allocation11 + $0x60] sm:$0xf]
    %v563 = vld [vmem:[#allocation11 + $0x64] sm:$0xf]
    %v564 = vld [vmem:[#allocation11 + $0x68] sm:$0xf]
    %v565 = vld [vmem:[#allocation11 + $0x6c] sm:$0xf]
    %v566 = vld [vmem:[#allocation11 + $0x70] sm:$0xf]
    %v567 = vld [vmem:[#allocation11 + $0x74] sm:$0xf]
    %v568 = vld [vmem:[#allocation11 + $0x78] sm:$0xf]
    %v569 = vld [vmem:[#allocation11 + $0x7c] sm:$0xf]
    %v572 = vunpack.c.l.b16 %v538
    %v573 = vunpack.c.l.b16 %v539
    %v574 = vpack.c.b16 %v573, %v572
    %576 = vmatprep.subr.bf16.mxu0 0
    %577 = vmatpush1.bf16.xpose.msra.mxu0 %v574
    %578 = vmatprep.subr.bf16.mxu0 0
    %579 = vmatpush1.bf16.xpose.msra.mxu0 0
    %580 = vmatprep.subr.bf16.mxu0 0
    %581 = vmatpush1.bf16.xpose.msra.mxu0 0
    %582 = vmatprep.subr.bf16.mxu0 0
    %583 = vmatpush1.bf16.xpose.msra.mxu0 0
    %584 = vmatprep.subr.bf16.mxu0 0
    %585 = vmatpush1.bf16.xpose.msra.mxu0 0
    %586 = vmatprep.subr.bf16.mxu0 0
    %587 = vmatpush1.bf16.xpose.msra.mxu0 0
    %588 = vmatprep.subr.bf16.mxu0 0
    %589 = vmatpush1.bf16.xpose.msra.mxu0 0
    %590 = vmatprep.subr.bf16.mxu0 0
    %591 = vmatpush1.bf16.xpose.msra.mxu0 0
    %592 = vmatprep.subr.bf16.mxu0 0
    %593 = vmatpush1.bf16.xpose.msra.mxu0 0
    %594 = vmatprep.subr.bf16.mxu0 0
    %595 = vmatpush1.bf16.xpose.msra.mxu0 0
    %596 = vmatprep.subr.bf16.mxu0 0
    %597 = vmatpush1.bf16.xpose.msra.mxu0 0
    %598 = vmatprep.subr.bf16.mxu0 0
    %599 = vmatpush1.bf16.xpose.msra.mxu0 0
    %600 = vmatprep.subr.bf16.mxu0 0
    %601 = vmatpush1.bf16.xpose.msra.mxu0 0
    %602 = vmatprep.subr.bf16.mxu0 0
    %603 = vmatpush1.bf16.xpose.msra.mxu0 0
    %604 = vmatprep.subr.bf16.mxu0 0
    %605 = vmatpush1.bf16.xpose.msra.mxu0 0
    %606 = vmatprep.subr.bf16.mxu0 0
    %607 = vmatpush1.bf16.xpose.msra.mxu0 0
    %608 = vmatprep.mubr.bf16.mxu0 0
    %609 = vmatmul.mubr.bf16.gmra.mrb[0].mxu0 %v522
    %v610 = vpop.f32.mrb[0].mxu0
    %v611 = vadd.f32 0.0, %v610
    %v612 = vpop.f32.mrb[0].mxu0
    %v613 = vpop.f32.mrb[0].mxu0
    %v614 = vpop.f32.mrb[0].mxu0
    %615 = vdwg.mxu0
    %v618 = vunpack.c.l.b16 %v540
    %v619 = vunpack.c.l.b16 %v541
    %v620 = vpack.c.b16 %v619, %v618
    %622 = vmatprep.subr.bf16.mxu0 0
    %623 = vmatpush1.bf16.xpose.msra.mxu0 %v620
    %624 = vmatprep.subr.bf16.mxu0 0
    %625 = vmatpush1.bf16.xpose.msra.mxu0 0
    %626 = vmatprep.subr.bf16.mxu0 0
    %627 = vmatpush1.bf16.xpose.msra.mxu0 0
    %628 = vmatprep.subr.bf16.mxu0 0
    %629 = vmatpush1.bf16.xpose.msra.mxu0 0
    %630 = vmatprep.subr.bf16.mxu0 0
    %631 = vmatpush1.bf16.xpose.msra.mxu0 0
    %632 = vmatprep.subr.bf16.mxu0 0
    %633 = vmatpush1.bf16.xpose.msra.mxu0 0
    %634 = vmatprep.subr.bf16.mxu0 0
    %635 = vmatpush1.bf16.xpose.msra.mxu0 0
    %636 = vmatprep.subr.bf16.mxu0 0
    %637 = vmatpush1.bf16.xpose.msra.mxu0 0
    %638 = vmatprep.subr.bf16.mxu0 0
    %639 = vmatpush1.bf16.xpose.msra.mxu0 0
    %640 = vmatprep.subr.bf16.mxu0 0
    %641 = vmatpush1.bf16.xpose.msra.mxu0 0
    %642 = vmatprep.subr.bf16.mxu0 0
    %643 = vmatpush1.bf16.xpose.msra.mxu0 0
    %644 = vmatprep.subr.bf16.mxu0 0
    %645 = vmatpush1.bf16.xpose.msra.mxu0 0
    %646 = vmatprep.subr.bf16.mxu0 0
    %647 = vmatpush1.bf16.xpose.msra.mxu0 0
    %648 = vmatprep.subr.bf16.mxu0 0
    %649 = vmatpush1.bf16.xpose.msra.mxu0 0
    %650 = vmatprep.subr.bf16.mxu0 0
    %651 = vmatpush1.bf16.xpose.msra.mxu0 0
    %652 = vmatprep.subr.bf16.mxu0 0
    %653 = vmatpush1.bf16.xpose.msra.mxu0 0
    %654 = vmatprep.mubr.bf16.mxu0 0
    %655 = vmatmul.mubr.bf16.gmra.mrb[0].mxu0 %v523
    %v656 = vpop.f32.mrb[0].mxu0
    %v657 = vadd.f32 0.0, %v656
    %v658 = vpop.f32.mrb[0].mxu0
    %v659 = vpop.f32.mrb[0].mxu0
    %v660 = vpop.f32.mrb[0].mxu0
    %661 = vdwg.mxu0
    %v664 = vunpack.c.l.b16 %v542
    %v665 = vunpack.c.l.b16 %v543
    %v666 = vpack.c.b16 %v665, %v664
    %668 = vmatprep.subr.bf16.mxu0 0
    %669 = vmatpush1.bf16.xpose.msra.mxu0 %v666
    %670 = vmatprep.subr.bf16.mxu0 0
    %671 = vmatpush1.bf16.xpose.msra.mxu0 0
    %672 = vmatprep.subr.bf16.mxu0 0
    %673 = vmatpush1.bf16.xpose.msra.mxu0 0
    %674 = vmatprep.subr.bf16.mxu0 0
    %675 = vmatpush1.bf16.xpose.msra.mxu0 0
    %676 = vmatprep.subr.bf16.mxu0 0
    %677 = vmatpush1.bf16.xpose.msra.mxu0 0
    %678 = vmatprep.subr.bf16.mxu0 0
    %679 = vmatpush1.bf16.xpose.msra.mxu0 0
    %680 = vmatprep.subr.bf16.mxu0 0
    %681 = vmatpush1.bf16.xpose.msra.mxu0 0
    %682 = vmatprep.subr.bf16.mxu0 0
    %683 = vmatpush1.bf16.xpose.msra.mxu0 0
    %684 = vmatprep.subr.bf16.mxu0 0
    %685 = vmatpush1.bf16.xpose.msra.mxu0 0
    %686 = vmatprep.subr.bf16.mxu0 0
    %687 = vmatpush1.bf16.xpose.msra.mxu0 0
    %688 = vmatprep.subr.bf16.mxu0 0
    %689 = vmatpush1.bf16.xpose.msra.mxu0 0
    %690 = vmatprep.subr.bf16.mxu0 0
    %691 = vmatpush1.bf16.xpose.msra.mxu0 0
    %692 = vmatprep.subr.bf16.mxu0 0
    %693 = vmatpush1.bf16.xpose.msra.mxu0 0
    %694 = vmatprep.subr.bf16.mxu0 0
    %695 = vmatpush1.bf16.xpose.msra.mxu0 0
    %696 = vmatprep.subr.bf16.mxu0 0
    %697 = vmatpush1.bf16.xpose.msra.mxu0 0
    %698 = vmatprep.subr.bf16.mxu0 0
    %699 = vmatpush1.bf16.xpose.msra.mxu0 0
    %700 = vmatprep.mubr.bf16.mxu0 0
    %701 = vmatmul.mubr.bf16.gmra.mrb[0].mxu0 %v524
    %v702 = vpop.f32.mrb[0].mxu0
    %v703 = vadd.f32 0.0, %v702
    %v704 = vpop.f32.mrb[0].mxu0
    %v705 = vpop.f32.mrb[0].mxu0
    %v706 = vpop.f32.mrb[0].mxu0
    %707 = vdwg.mxu0
    %v710 = vunpack.c.l.b16 %v544
    %v711 = vunpack.c.l.b16 %v545
    %v712 = vpack.c.b16 %v711, %v710
    %714 = vmatprep.subr.bf16.mxu0 0
    %715 = vmatpush1.bf16.xpose.msra.mxu0 %v712
    %716 = vmatprep.subr.bf16.mxu0 0
    %717 = vmatpush1.bf16.xpose.msra.mxu0 0
    %718 = vmatprep.subr.bf16.mxu0 0
    %719 = vmatpush1.bf16.xpose.msra.mxu0 0
    %720 = vmatprep.subr.bf16.mxu0 0
    %721 = vmatpush1.bf16.xpose.msra.mxu0 0
    %722 = vmatprep.subr.bf16.mxu0 0
    %723 = vmatpush1.bf16.xpose.msra.mxu0 0
    %724 = vmatprep.subr.bf16.mxu0 0
    %725 = vmatpush1.bf16.xpose.msra.mxu0 0
    %726 = vmatprep.subr.bf16.mxu0 0
    %727 = vmatpush1.bf16.xpose.msra.mxu0 0
    %728 = vmatprep.subr.bf16.mxu0 0
    %729 = vmatpush1.bf16.xpose.msra.mxu0 0
    %730 = vmatprep.subr.bf16.mxu0 0
    %731 = vmatpush1.bf16.xpose.msra.mxu0 0
    %732 = vmatprep.subr.bf16.mxu0 0
    %733 = vmatpush1.bf16.xpose.msra.mxu0 0
    %734 = vmatprep.subr.bf16.mxu0 0
    %735 = vmatpush1.bf16.xpose.msra.mxu0 0
    %736 = vmatprep.subr.bf16.mxu0 0
    %737 = vmatpush1.bf16.xpose.msra.mxu0 0
    %738 = vmatprep.subr.bf16.mxu0 0
    %739 = vmatpush1.bf16.xpose.msra.mxu0 0
    %740 = vmatprep.subr.bf16.mxu0 0
    %741 = vmatpush1.bf16.xpose.msra.mxu0 0
    %742 = vmatprep.subr.bf16.mxu0 0
    %743 = vmatpush1.bf16.xpose.msra.mxu0 0
    %744 = vmatprep.subr.bf16.mxu0 0
    %745 = vmatpush1.bf16.xpose.msra.mxu0 0
    %746 = vmatprep.mubr.bf16.mxu0 0
    %747 = vmatmul.mubr.bf16.gmra.mrb[0].mxu0 %v525
    %v748 = vpop.f32.mrb[0].mxu0
    %v749 = vadd.f32 0.0, %v748
    %v750 = vpop.f32.mrb[0].mxu0
    %v751 = vpop.f32.mrb[0].mxu0
    %v752 = vpop.f32.mrb[0].mxu0
    %753 = vdwg.mxu0
    %v756 = vunpack.c.l.b16 %v546
    %v757 = vunpack.c.l.b16 %v547
    %v758 = vpack.c.b16 %v757, %v756
    %760 = vmatprep.subr.bf16.mxu0 0
    %761 = vmatpush1.bf16.xpose.msra.mxu0 %v758
    %762 = vmatprep.subr.bf16.mxu0 0
    %763 = vmatpush1.bf16.xpose.msra.mxu0 0
    %764 = vmatprep.subr.bf16.mxu0 0
    %765 = vmatpush1.bf16.xpose.msra.mxu0 0
    %766 = vmatprep.subr.bf16.mxu0 0
    %767 = vmatpush1.bf16.xpose.msra.mxu0 0
    %768 = vmatprep.subr.bf16.mxu0 0
    %769 = vmatpush1.bf16.xpose.msra.mxu0 0
    %770 = vmatprep.subr.bf16.mxu0 0
    %771 = vmatpush1.bf16.xpose.msra.mxu0 0
    %772 = vmatprep.subr.bf16.mxu0 0
    %773 = vmatpush1.bf16.xpose.msra.mxu0 0
    %774 = vmatprep.subr.bf16.mxu0 0
    %775 = vmatpush1.bf16.xpose.msra.mxu0 0
    %776 = vmatprep.subr.bf16.mxu0 0
    %777 = vmatpush1.bf16.xpose.msra.mxu0 0
    %778 = vmatprep.subr.bf16.mxu0 0
    %779 = vmatpush1.bf16.xpose.msra.mxu0 0
    %780 = vmatprep.subr.bf16.mxu0 0
    %781 = vmatpush1.bf16.xpose.msra.mxu0 0
    %782 = vmatprep.subr.bf16.mxu0 0
    %783 = vmatpush1.bf16.xpose.msra.mxu0 0
    %784 = vmatprep.subr.bf16.mxu0 0
    %785 = vmatpush1.bf16.xpose.msra.mxu0 0
    %786 = vmatprep.subr.bf16.mxu0 0
    %787 = vmatpush1.bf16.xpose.msra.mxu0 0
    %788 = vmatprep.subr.bf16.mxu0 0
    %789 = vmatpush1.bf16.xpose.msra.mxu0 0
    %790 = vmatprep.subr.bf16.mxu0 0
    %791 = vmatpush1.bf16.xpose.msra.mxu0 0
    %792 = vmatprep.mubr.bf16.mxu0 0
    %793 = vmatmul.mubr.bf16.gmra.mrb[0].mxu0 %v526
    %v794 = vpop.f32.mrb[0].mxu0
    %v795 = vadd.f32 0.0, %v794
    %v796 = vpop.f32.mrb[0].mxu0
    %v797 = vpop.f32.mrb[0].mxu0
    %v798 = vpop.f32.mrb[0].mxu0
    %799 = vdwg.mxu0
    %v802 = vunpack.c.l.b16 %v548
    %v803 = vunpack.c.l.b16 %v549
    %v804 = vpack.c.b16 %v803, %v802
    %806 = vmatprep.subr.bf16.mxu0 0
    %807 = vmatpush1.bf16.xpose.msra.mxu0 %v804
    %808 = vmatprep.subr.bf16.mxu0 0
    %809 = vmatpush1.bf16.xpose.msra.mxu0 0
    %810 = vmatprep.subr.bf16.mxu0 0
    %811 = vmatpush1.bf16.xpose.msra.mxu0 0
    %812 = vmatprep.subr.bf16.mxu0 0
    %813 = vmatpush1.bf16.xpose.msra.mxu0 0
    %814 = vmatprep.subr.bf16.mxu0 0
    %815 = vmatpush1.bf16.xpose.msra.mxu0 0
    %816 = vmatprep.subr.bf16.mxu0 0
    %817 = vmatpush1.bf16.xpose.msra.mxu0 0
    %818 = vmatprep.subr.bf16.mxu0 0
    %819 = vmatpush1.bf16.xpose.msra.mxu0 0
    %820 = vmatprep.subr.bf16.mxu0 0
    %821 = vmatpush1.bf16.xpose.msra.mxu0 0
    %822 = vmatprep.subr.bf16.mxu0 0
    %823 = vmatpush1.bf16.xpose.msra.mxu0 0
    %824 = vmatprep.subr.bf16.mxu0 0
    %825 = vmatpush1.bf16.xpose.msra.mxu0 0
    %826 = vmatprep.subr.bf16.mxu0 0
    %827 = vmatpush1.bf16.xpose.msra.mxu0 0
    %828 = vmatprep.subr.bf16.mxu0 0
    %829 = vmatpush1.bf16.xpose.msra.mxu0 0
    %830 = vmatprep.subr.bf16.mxu0 0
    %831 = vmatpush1.bf16.xpose.msra.mxu0 0
    %832 = vmatprep.subr.bf16.mxu0 0
    %833 = vmatpush1.bf16.xpose.msra.mxu0 0
    %834 = vmatprep.subr.bf16.mxu0 0
    %835 = vmatpush1.bf16.xpose.msra.mxu0 0
    %836 = vmatprep.subr.bf16.mxu0 0
    %837 = vmatpush1.bf16.xpose.msra.mxu0 0
    %838 = vmatprep.mubr.bf16.mxu0 0
    %839 = vmatmul.mubr.bf16.gmra.mrb[0].mxu0 %v527
    %v840 = vpop.f32.mrb[0].mxu0
    %v841 = vadd.f32 0.0, %v840
    %v842 = vpop.f32.mrb[0].mxu0
    %v843 = vpop.f32.mrb[0].mxu0
    %v844 = vpop.f32.mrb[0].mxu0
    %845 = vdwg.mxu0
    %v848 = vunpack.c.l.b16 %v550
    %v849 = vunpack.c.l.b16 %v551
    %v850 = vpack.c.b16 %v849, %v848
    %852 = vmatprep.subr.bf16.mxu0 0
    %853 = vmatpush1.bf16.xpose.msra.mxu0 %v850
    %854 = vmatprep.subr.bf16.mxu0 0
    %855 = vmatpush1.bf16.xpose.msra.mxu0 0
    %856 = vmatprep.subr.bf16.mxu0 0
    %857 = vmatpush1.bf16.xpose.msra.mxu0 0
    %858 = vmatprep.subr.bf16.mxu0 0
    %859 = vmatpush1.bf16.xpose.msra.mxu0 0
    %860 = vmatprep.subr.bf16.mxu0 0
    %861 = vmatpush1.bf16.xpose.msra.mxu0 0
    %862 = vmatprep.subr.bf16.mxu0 0
    %863 = vmatpush1.bf16.xpose.msra.mxu0 0
    %864 = vmatprep.subr.bf16.mxu0 0
    %865 = vmatpush1.bf16.xpose.msra.mxu0 0
    %866 = vmatprep.subr.bf16.mxu0 0
    %867 = vmatpush1.bf16.xpose.msra.mxu0 0
    %868 = vmatprep.subr.bf16.mxu0 0
    %869 = vmatpush1.bf16.xpose.msra.mxu0 0
    %870 = vmatprep.subr.bf16.mxu0 0
    %871 = vmatpush1.bf16.xpose.msra.mxu0 0
    %872 = vmatprep.subr.bf16.mxu0 0
    %873 = vmatpush1.bf16.xpose.msra.mxu0 0
    %874 = vmatprep.subr.bf16.mxu0 0
    %875 = vmatpush1.bf16.xpose.msra.mxu0 0
    %876 = vmatprep.subr.bf16.mxu0 0
    %877 = vmatpush1.bf16.xpose.msra.mxu0 0
    %878 = vmatprep.subr.bf16.mxu0 0
    %879 = vmatpush1.bf16.xpose.msra.mxu0 0
    %880 = vmatprep.subr.bf16.mxu0 0
    %881 = vmatpush1.bf16.xpose.msra.mxu0 0
    %882 = vmatprep.subr.bf16.mxu0 0
    %883 = vmatpush1.bf16.xpose.msra.mxu0 0
    %884 = vmatprep.mubr.bf16.mxu0 0
    %885 = vmatmul.mubr.bf16.gmra.mrb[0].mxu0 %v528
    %v886 = vpop.f32.mrb[0].mxu0
    %v887 = vadd.f32 0.0, %v886
    %v888 = vpop.f32.mrb[0].mxu0
    %v889 = vpop.f32.mrb[0].mxu0
    %v890 = vpop.f32.mrb[0].mxu0
    %891 = vdwg.mxu0
    %v894 = vunpack.c.l.b16 %v552
    %v895 = vunpack.c.l.b16 %v553
    %v896 = vpack.c.b16 %v895, %v894
    %898 = vmatprep.subr.bf16.mxu0 0
    %899 = vmatpush1.bf16.xpose.msra.mxu0 %v896
    %900 = vmatprep.subr.bf16.mxu0 0
    %901 = vmatpush1.bf16.xpose.msra.mxu0 0
    %902 = vmatprep.subr.bf16.mxu0 0
    %903 = vmatpush1.bf16.xpose.msra.mxu0 0
    %904 = vmatprep.subr.bf16.mxu0 0
    %905 = vmatpush1.bf16.xpose.msra.mxu0 0
    %906 = vmatprep.subr.bf16.mxu0 0
    %907 = vmatpush1.bf16.xpose.msra.mxu0 0
    %908 = vmatprep.subr.bf16.mxu0 0
    %909 = vmatpush1.bf16.xpose.msra.mxu0 0
    %910 = vmatprep.subr.bf16.mxu0 0
    %911 = vmatpush1.bf16.xpose.msra.mxu0 0
    %912 = vmatprep.subr.bf16.mxu0 0
    %913 = vmatpush1.bf16.xpose.msra.mxu0 0
    %914 = vmatprep.subr.bf16.mxu0 0
    %915 = vmatpush1.bf16.xpose.msra.mxu0 0
    %916 = vmatprep.subr.bf16.mxu0 0
    %917 = vmatpush1.bf16.xpose.msra.mxu0 0
    %918 = vmatprep.subr.bf16.mxu0 0
    %919 = vmatpush1.bf16.xpose.msra.mxu0 0
    %920 = vmatprep.subr.bf16.mxu0 0
    %921 = vmatpush1.bf16.xpose.msra.mxu0 0
    %922 = vmatprep.subr.bf16.mxu0 0
    %923 = vmatpush1.bf16.xpose.msra.mxu0 0
    %924 = vmatprep.subr.bf16.mxu0 0
    %925 = vmatpush1.bf16.xpose.msra.mxu0 0
    %926 = vmatprep.subr.bf16.mxu0 0
    %927 = vmatpush1.bf16.xpose.msra.mxu0 0
    %928 = vmatprep.subr.bf16.mxu0 0
    %929 = vmatpush1.bf16.xpose.msra.mxu0 0
    %930 = vmatprep.mubr.bf16.mxu0 0
    %931 = vmatmul.mubr.bf16.gmra.mrb[0].mxu0 %v529
    %v932 = vpop.f32.mrb[0].mxu0
    %v933 = vadd.f32 0.0, %v932
    %v934 = vpop.f32.mrb[0].mxu0
    %v935 = vpop.f32.mrb[0].mxu0
    %v936 = vpop.f32.mrb[0].mxu0
    %937 = vdwg.mxu0
    %v940 = vunpack.c.l.b16 %v554
    %v941 = vunpack.c.l.b16 %v555
    %v942 = vpack.c.b16 %v941, %v940
    %944 = vmatprep.subr.bf16.mxu0 0
    %945 = vmatpush1.bf16.xpose.msra.mxu0 %v942
    %946 = vmatprep.subr.bf16.mxu0 0
    %947 = vmatpush1.bf16.xpose.msra.mxu0 0
    %948 = vmatprep.subr.bf16.mxu0 0
    %949 = vmatpush1.bf16.xpose.msra.mxu0 0
    %950 = vmatprep.subr.bf16.mxu0 0
    %951 = vmatpush1.bf16.xpose.msra.mxu0 0
    %952 = vmatprep.subr.bf16.mxu0 0
    %953 = vmatpush1.bf16.xpose.msra.mxu0 0
    %954 = vmatprep.subr.bf16.mxu0 0
    %955 = vmatpush1.bf16.xpose.msra.mxu0 0
    %956 = vmatprep.subr.bf16.mxu0 0
    %957 = vmatpush1.bf16.xpose.msra.mxu0 0
    %958 = vmatprep.subr.bf16.mxu0 0
    %959 = vmatpush1.bf16.xpose.msra.mxu0 0
    %960 = vmatprep.subr.bf16.mxu0 0
    %961 = vmatpush1.bf16.xpose.msra.mxu0 0
    %962 = vmatprep.subr.bf16.mxu0 0
    %963 = vmatpush1.bf16.xpose.msra.mxu0 0
    %964 = vmatprep.subr.bf16.mxu0 0
    %965 = vmatpush1.bf16.xpose.msra.mxu0 0
    %966 = vmatprep.subr.bf16.mxu0 0
    %967 = vmatpush1.bf16.xpose.msra.mxu0 0
    %968 = vmatprep.subr.bf16.mxu0 0
    %969 = vmatpush1.bf16.xpose.msra.mxu0 0
    %970 = vmatprep.subr.bf16.mxu0 0
    %971 = vmatpush1.bf16.xpose.msra.mxu0 0
    %972 = vmatprep.subr.bf16.mxu0 0
    %973 = vmatpush1.bf16.xpose.msra.mxu0 0
    %974 = vmatprep.subr.bf16.mxu0 0
    %975 = vmatpush1.bf16.xpose.msra.mxu0 0
    %976 = vmatprep.mubr.bf16.mxu0 0
    %977 = vmatmul.mubr.bf16.gmra.mrb[0].mxu0 %v530
    %v978 = vpop.f32.mrb[0].mxu0
    %v979 = vadd.f32 0.0, %v978
    %v980 = vpop.f32.mrb[0].mxu0
    %v981 = vpop.f32.mrb[0].mxu0
    %v982 = vpop.f32.mrb[0].mxu0
    %983 = vdwg.mxu0
    %v986 = vunpack.c.l.b16 %v556
    %v987 = vunpack.c.l.b16 %v557
    %v988 = vpack.c.b16 %v987, %v986
    %990 = vmatprep.subr.bf16.mxu0 0
    %991 = vmatpush1.bf16.xpose.msra.mxu0 %v988
    %992 = vmatprep.subr.bf16.mxu0 0
    %993 = vmatpush1.bf16.xpose.msra.mxu0 0
    %994 = vmatprep.subr.bf16.mxu0 0
    %995 = vmatpush1.bf16.xpose.msra.mxu0 0
    %996 = vmatprep.subr.bf16.mxu0 0
    %997 = vmatpush1.bf16.xpose.msra.mxu0 0
    %998 = vmatprep.subr.bf16.mxu0 0
    %999 = vmatpush1.bf16.xpose.msra.mxu0 0
    %1000 = vmatprep.subr.bf16.mxu0 0
    %1001 = vmatpush1.bf16.xpose.msra.mxu0 0
    %1002 = vmatprep.subr.bf16.mxu0 0
    %1003 = vmatpush1.bf16.xpose.msra.mxu0 0
    %1004 = vmatprep.subr.bf16.mxu0 0
    %1005 = vmatpush1.bf16.xpose.msra.mxu0 0
    %1006 = vmatprep.subr.bf16.mxu0 0
    %1007 = vmatpush1.bf16.xpose.msra.mxu0 0
    %1008 = vmatprep.subr.bf16.mxu0 0
    %1009 = vmatpush1.bf16.xpose.msra.mxu0 0
    %1010 = vmatprep.subr.bf16.mxu0 0
    %1011 = vmatpush1.bf16.xpose.msra.mxu0 0
    %1012 = vmatprep.subr.bf16.mxu0 0
    %1013 = vmatpush1.bf16.xpose.msra.mxu0 0
    %1014 = vmatprep.subr.bf16.mxu0 0
    %1015 = vmatpush1.bf16.xpose.msra.mxu0 0
    %1016 = vmatprep.subr.bf16.mxu0 0
    %1017 = vmatpush1.bf16.xpose.msra.mxu0 0
    %1018 = vmatprep.subr.bf16.mxu0 0
    %1019 = vmatpush1.bf16.xpose.msra.mxu0 0
    %1020 = vmatprep.subr.bf16.mxu0 0
    %1021 = vmatpush1.bf16.xpose.msra.mxu0 0
    %1022 = vmatprep.mubr.bf16.mxu0 0
    %1023 = vmatmul.mubr.bf16.gmra.mrb[0].mxu0 %v531
    %v1024 = vpop.f32.mrb[0].mxu0
    %v1025 = vadd.f32 0.0, %v1024
    %v1026 = vpop.f32.mrb[0].mxu0
    %v1027 = vpop.f32.mrb[0].mxu0
    %v1028 = vpop.f32.mrb[0].mxu0
    %1029 = vdwg.mxu0
    %v1032 = vunpack.c.l.b16 %v558
    %v1033 = vunpack.c.l.b16 %v559
    %v1034 = vpack.c.b16 %v1033, %v1032
    %1036 = vmatprep.subr.bf16.mxu0 0
    %1037 = vmatpush1.bf16.xpose.msra.mxu0 %v1034
    %1038 = vmatprep.subr.bf16.mxu0 0
    %1039 = vmatpush1.bf16.xpose.msra.mxu0 0
    %1040 = vmatprep.subr.bf16.mxu0 0
    %1041 = vmatpush1.bf16.xpose.msra.mxu0 0
    %1042 = vmatprep.subr.bf16.mxu0 0
    %1043 = vmatpush1.bf16.xpose.msra.mxu0 0
    %1044 = vmatprep.subr.bf16.mxu0 0
    %1045 = vmatpush1.bf16.xpose.msra.mxu0 0
    %1046 = vmatprep.subr.bf16.mxu0 0
    %1047 = vmatpush1.bf16.xpose.msra.mxu0 0
    %1048 = vmatprep.subr.bf16.mxu0 0
    %1049 = vmatpush1.bf16.xpose.msra.mxu0 0
    %1050 = vmatprep.subr.bf16.mxu0 0
    %1051 = vmatpush1.bf16.xpose.msra.mxu0 0
    %1052 = vmatprep.subr.bf16.mxu0 0
    %1053 = vmatpush1.bf16.xpose.msra.mxu0 0
    %1054 = vmatprep.subr.bf16.mxu0 0
    %1055 = vmatpush1.bf16.xpose.msra.mxu0 0
    %1056 = vmatprep.subr.bf16.mxu0 0
    %1057 = vmatpush1.bf16.xpose.msra.mxu0 0
    %1058 = vmatprep.subr.bf16.mxu0 0
    %1059 = vmatpush1.bf16.xpose.msra.mxu0 0
    %1060 = vmatprep.subr.bf16.mxu0 0
    %1061 = vmatpush1.bf16.xpose.msra.mxu0 0
    %1062 = vmatprep.subr.bf16.mxu0 0
    %1063 = vmatpush1.bf16.xpose.msra.mxu0 0
    %1064 = vmatprep.subr.bf16.mxu0 0
    %1065 = vmatpush1.bf16.xpose.msra.mxu0 0
    %1066 = vmatprep.subr.bf16.mxu0 0
    %1067 = vmatpush1.bf16.xpose.msra.mxu0 0
    %1068 = vmatprep.mubr.bf16.mxu0 0
    %1069 = vmatmul.mubr.bf16.gmra.mrb[0].mxu0 %v532
    %v1070 = vpop.f32.mrb[0].mxu0
    %v1071 = vadd.f32 0.0, %v1070
    %v1072 = vpop.f32.mrb[0].mxu0
    %v1073 = vpop.f32.mrb[0].mxu0
    %v1074 = vpop.f32.mrb[0].mxu0
    %1075 = vdwg.mxu0
    %v1078 = vunpack.c.l.b16 %v560
    %v1079 = vunpack.c.l.b16 %v561
    %v1080 = vpack.c.b16 %v1079, %v1078
    %1082 = vmatprep.subr.bf16.mxu0 0
    %1083 = vmatpush1.bf16.xpose.msra.mxu0 %v1080
    %1084 = vmatprep.subr.bf16.mxu0 0
    %1085 = vmatpush1.bf16.xpose.msra.mxu0 0
    %1086 = vmatprep.subr.bf16.mxu0 0
    %1087 = vmatpush1.bf16.xpose.msra.mxu0 0
    %1088 = vmatprep.subr.bf16.mxu0 0
    %1089 = vmatpush1.bf16.xpose.msra.mxu0 0
    %1090 = vmatprep.subr.bf16.mxu0 0
    %1091 = vmatpush1.bf16.xpose.msra.mxu0 0
    %1092 = vmatprep.subr.bf16.mxu0 0
    %1093 = vmatpush1.bf16.xpose.msra.mxu0 0
    %1094 = vmatprep.subr.bf16.mxu0 0
    %1095 = vmatpush1.bf16.xpose.msra.mxu0 0
    %1096 = vmatprep.subr.bf16.mxu0 0
    %1097 = vmatpush1.bf16.xpose.msra.mxu0 0
    %1098 = vmatprep.subr.bf16.mxu0 0
    %1099 = vmatpush1.bf16.xpose.msra.mxu0 0
    %1100 = vmatprep.subr.bf16.mxu0 0
    %1101 = vmatpush1.bf16.xpose.msra.mxu0 0
    %1102 = vmatprep.subr.bf16.mxu0 0
    %1103 = vmatpush1.bf16.xpose.msra.mxu0 0
    %1104 = vmatprep.subr.bf16.mxu0 0
    %1105 = vmatpush1.bf16.xpose.msra.mxu0 0
    %1106 = vmatprep.subr.bf16.mxu0 0
    %1107 = vmatpush1.bf16.xpose.msra.mxu0 0
    %1108 = vmatprep.subr.bf16.mxu0 0
    %1109 = vmatpush1.bf16.xpose.msra.mxu0 0
    %1110 = vmatprep.subr.bf16.mxu0 0
    %1111 = vmatpush1.bf16.xpose.msra.mxu0 0
    %1112 = vmatprep.subr.bf16.mxu0 0
    %1113 = vmatpush1.bf16.xpose.msra.mxu0 0
    %1114 = vmatprep.mubr.bf16.mxu0 0
    %1115 = vmatmul.mubr.bf16.gmra.mrb[0].mxu0 %v533
    %v1116 = vpop.f32.mrb[0].mxu0
    %v1117 = vadd.f32 0.0, %v1116
    %v1118 = vpop.f32.mrb[0].mxu0
    %v1119 = vpop.f32.mrb[0].mxu0
    %v1120 = vpop.f32.mrb[0].mxu0
    %1121 = vdwg.mxu0
    %v1124 = vunpack.c.l.b16 %v562
    %v1125 = vunpack.c.l.b16 %v563
    %v1126 = vpack.c.b16 %v1125, %v1124
    %1128 = vmatprep.subr.bf16.mxu0 0
    %1129 = vmatpush1.bf16.xpose.msra.mxu0 %v1126
    %1130 = vmatprep.subr.bf16.mxu0 0
    %1131 = vmatpush1.bf16.xpose.msra.mxu0 0
    %1132 = vmatprep.subr.bf16.mxu0 0
    %1133 = vmatpush1.bf16.xpose.msra.mxu0 0
    %1134 = vmatprep.subr.bf16.mxu0 0
    %1135 = vmatpush1.bf16.xpose.msra.mxu0 0
    %1136 = vmatprep.subr.bf16.mxu0 0
    %1137 = vmatpush1.bf16.xpose.msra.mxu0 0
    %1138 = vmatprep.subr.bf16.mxu0 0
    %1139 = vmatpush1.bf16.xpose.msra.mxu0 0
    %1140 = vmatprep.subr.bf16.mxu0 0
    %1141 = vmatpush1.bf16.xpose.msra.mxu0 0
    %1142 = vmatprep.subr.bf16.mxu0 0
    %1143 = vmatpush1.bf16.xpose.msra.mxu0 0
    %1144 = vmatprep.subr.bf16.mxu0 0
    %1145 = vmatpush1.bf16.xpose.msra.mxu0 0
    %1146 = vmatprep.subr.bf16.mxu0 0
    %1147 = vmatpush1.bf16.xpose.msra.mxu0 0
    %1148 = vmatprep.subr.bf16.mxu0 0
    %1149 = vmatpush1.bf16.xpose.msra.mxu0 0
    %1150 = vmatprep.subr.bf16.mxu0 0
    %1151 = vmatpush1.bf16.xpose.msra.mxu0 0
    %1152 = vmatprep.subr.bf16.mxu0 0
    %1153 = vmatpush1.bf16.xpose.msra.mxu0 0
    %1154 = vmatprep.subr.bf16.mxu0 0
    %1155 = vmatpush1.bf16.xpose.msra.mxu0 0
    %1156 = vmatprep.subr.bf16.mxu0 0
    %1157 = vmatpush1.bf16.xpose.msra.mxu0 0
    %1158 = vmatprep.subr.bf16.mxu0 0
    %1159 = vmatpush1.bf16.xpose.msra.mxu0 0
    %1160 = vmatprep.mubr.bf16.mxu0 0
    %1161 = vmatmul.mubr.bf16.gmra.mrb[0].mxu0 %v534
    %v1162 = vpop.f32.mrb[0].mxu0
    %v1163 = vadd.f32 0.0, %v1162
    %v1164 = vpop.f32.mrb[0].mxu0
    %v1165 = vpop.f32.mrb[0].mxu0
    %v1166 = vpop.f32.mrb[0].mxu0
    %1167 = vdwg.mxu0
    %v1170 = vunpack.c.l.b16 %v564
    %v1171 = vunpack.c.l.b16 %v565
    %v1172 = vpack.c.b16 %v1171, %v1170
    %1174 = vmatprep.subr.bf16.mxu0 0
    %1175 = vmatpush1.bf16.xpose.msra.mxu0 %v1172
    %1176 = vmatprep.subr.bf16.mxu0 0
    %1177 = vmatpush1.bf16.xpose.msra.mxu0 0
    %1178 = vmatprep.subr.bf16.mxu0 0
    %1179 = vmatpush1.bf16.xpose.msra.mxu0 0
    %1180 = vmatprep.subr.bf16.mxu0 0
    %1181 = vmatpush1.bf16.xpose.msra.mxu0 0
    %1182 = vmatprep.subr.bf16.mxu0 0
    %1183 = vmatpush1.bf16.xpose.msra.mxu0 0
    %1184 = vmatprep.subr.bf16.mxu0 0
    %1185 = vmatpush1.bf16.xpose.msra.mxu0 0
    %1186 = vmatprep.subr.bf16.mxu0 0
    %1187 = vmatpush1.bf16.xpose.msra.mxu0 0
    %1188 = vmatprep.subr.bf16.mxu0 0
    %1189 = vmatpush1.bf16.xpose.msra.mxu0 0
    %1190 = vmatprep.subr.bf16.mxu0 0
    %1191 = vmatpush1.bf16.xpose.msra.mxu0 0
    %1192 = vmatprep.subr.bf16.mxu0 0
    %1193 = vmatpush1.bf16.xpose.msra.mxu0 0
    %1194 = vmatprep.subr.bf16.mxu0 0
    %1195 = vmatpush1.bf16.xpose.msra.mxu0 0
    %1196 = vmatprep.subr.bf16.mxu0 0
    %1197 = vmatpush1.bf16.xpose.msra.mxu0 0
    %1198 = vmatprep.subr.bf16.mxu0 0
    %1199 = vmatpush1.bf16.xpose.msra.mxu0 0
    %1200 = vmatprep.subr.bf16.mxu0 0
    %1201 = vmatpush1.bf16.xpose.msra.mxu0 0
    %1202 = vmatprep.subr.bf16.mxu0 0
    %1203 = vmatpush1.bf16.xpose.msra.mxu0 0
    %1204 = vmatprep.subr.bf16.mxu0 0
    %1205 = vmatpush1.bf16.xpose.msra.mxu0 0
    %1206 = vmatprep.mubr.bf16.mxu0 0
    %1207 = vmatmul.mubr.bf16.gmra.mrb[0].mxu0 %v535
    %v1208 = vpop.f32.mrb[0].mxu0
    %v1209 = vadd.f32 0.0, %v1208
    %v1210 = vpop.f32.mrb[0].mxu0
    %v1211 = vpop.f32.mrb[0].mxu0
    %v1212 = vpop.f32.mrb[0].mxu0
    %1213 = vdwg.mxu0
    %v1216 = vunpack.c.l.b16 %v566
    %v1217 = vunpack.c.l.b16 %v567
    %v1218 = vpack.c.b16 %v1217, %v1216
    %1220 = vmatprep.subr.bf16.mxu0 0
    %1221 = vmatpush1.bf16.xpose.msra.mxu0 %v1218
    %1222 = vmatprep.subr.bf16.mxu0 0
    %1223 = vmatpush1.bf16.xpose.msra.mxu0 0
    %1224 = vmatprep.subr.bf16.mxu0 0
    %1225 = vmatpush1.bf16.xpose.msra.mxu0 0
    %1226 = vmatprep.subr.bf16.mxu0 0
    %1227 = vmatpush1.bf16.xpose.msra.mxu0 0
    %1228 = vmatprep.subr.bf16.mxu0 0
    %1229 = vmatpush1.bf16.xpose.msra.mxu0 0
    %1230 = vmatprep.subr.bf16.mxu0 0
    %1231 = vmatpush1.bf16.xpose.msra.mxu0 0
    %1232 = vmatprep.subr.bf16.mxu0 0
    %1233 = vmatpush1.bf16.xpose.msra.mxu0 0
    %1234 = vmatprep.subr.bf16.mxu0 0
    %1235 = vmatpush1.bf16.xpose.msra.mxu0 0
    %1236 = vmatprep.subr.bf16.mxu0 0
    %1237 = vmatpush1.bf16.xpose.msra.mxu0 0
    %1238 = vmatprep.subr.bf16.mxu0 0
    %1239 = vmatpush1.bf16.xpose.msra.mxu0 0
    %1240 = vmatprep.subr.bf16.mxu0 0
    %1241 = vmatpush1.bf16.xpose.msra.mxu0 0
    %1242 = vmatprep.subr.bf16.mxu0 0
    %1243 = vmatpush1.bf16.xpose.msra.mxu0 0
    %1244 = vmatprep.subr.bf16.mxu0 0
    %1245 = vmatpush1.bf16.xpose.msra.mxu0 0
    %1246 = vmatprep.subr.bf16.mxu0 0
    %1247 = vmatpush1.bf16.xpose.msra.mxu0 0
    %1248 = vmatprep.subr.bf16.mxu0 0
    %1249 = vmatpush1.bf16.xpose.msra.mxu0 0
    %1250 = vmatprep.subr.bf16.mxu0 0
    %1251 = vmatpush1.bf16.xpose.msra.mxu0 0
    %1252 = vmatprep.mubr.bf16.mxu0 0
    %1253 = vmatmul.mubr.bf16.gmra.mrb[0].mxu0 %v536
    %v1254 = vpop.f32.mrb[0].mxu0
    %v1255 = vadd.f32 0.0, %v1254
    %v1256 = vpop.f32.mrb[0].mxu0
    %v1257 = vpop.f32.mrb[0].mxu0
    %v1258 = vpop.f32.mrb[0].mxu0
    %1259 = vdwg.mxu0
    %v1262 = vunpack.c.l.b16 %v568
    %v1263 = vunpack.c.l.b16 %v569
    %v1264 = vpack.c.b16 %v1263, %v1262
    %1266 = vmatprep.subr.bf16.mxu0 0
    %1267 = vmatpush1.bf16.xpose.msra.mxu0 %v1264
    %1268 = vmatprep.subr.bf16.mxu0 0
    %1269 = vmatpush1.bf16.xpose.msra.mxu0 0
    %1270 = vmatprep.subr.bf16.mxu0 0
    %1271 = vmatpush1.bf16.xpose.msra.mxu0 0
    %1272 = vmatprep.subr.bf16.mxu0 0
    %1273 = vmatpush1.bf16.xpose.msra.mxu0 0
    %1274 = vmatprep.subr.bf16.mxu0 0
    %1275 = vmatpush1.bf16.xpose.msra.mxu0 0
    %1276 = vmatprep.subr.bf16.mxu0 0
    %1277 = vmatpush1.bf16.xpose.msra.mxu0 0
    %1278 = vmatprep.subr.bf16.mxu0 0
    %1279 = vmatpush1.bf16.xpose.msra.mxu0 0
    %1280 = vmatprep.subr.bf16.mxu0 0
    %1281 = vmatpush1.bf16.xpose.msra.mxu0 0
    %1282 = vmatprep.subr.bf16.mxu0 0
    %1283 = vmatpush1.bf16.xpose.msra.mxu0 0
    %1284 = vmatprep.subr.bf16.mxu0 0
    %1285 = vmatpush1.bf16.xpose.msra.mxu0 0
    %1286 = vmatprep.subr.bf16.mxu0 0
    %1287 = vmatpush1.bf16.xpose.msra.mxu0 0
    %1288 = vmatprep.subr.bf16.mxu0 0
    %1289 = vmatpush1.bf16.xpose.msra.mxu0 0
    %1290 = vmatprep.subr.bf16.mxu0 0
    %1291 = vmatpush1.bf16.xpose.msra.mxu0 0
    %1292 = vmatprep.subr.bf16.mxu0 0
    %1293 = vmatpush1.bf16.xpose.msra.mxu0 0
    %1294 = vmatprep.subr.bf16.mxu0 0
    %1295 = vmatpush1.bf16.xpose.msra.mxu0 0
    %1296 = vmatprep.subr.bf16.mxu0 0
    %1297 = vmatpush1.bf16.xpose.msra.mxu0 0
    %1298 = vmatprep.mubr.bf16.mxu0 0
    %1299 = vmatmul.mubr.bf16.gmra.mrb[0].mxu0 %v537
    %v1300 = vpop.f32.mrb[0].mxu0
    %v1301 = vadd.f32 0.0, %v1300
    %v1302 = vpop.f32.mrb[0].mxu0
    %v1303 = vpop.f32.mrb[0].mxu0
    %v1304 = vpop.f32.mrb[0].mxu0
    %1305 = vdwg.mxu0
    %vm1306 = vcmask 123904
    %v1307 = vsel %vm1306, %v611, 0.0
    %v1308 = vsel %vm1306, %v657, 0.0
    %v1309 = vadd.f32 %v1307, %v1308
    %v1310 = vsel %vm1306, %v703, 0.0
    %v1311 = vadd.f32 %v1309, %v1310
    %v1312 = vsel %vm1306, %v749, 0.0
    %v1313 = vadd.f32 %v1311, %v1312
    %v1314 = vsel %vm1306, %v795, 0.0
    %v1315 = vadd.f32 %v1313, %v1314
    %v1316 = vsel %vm1306, %v841, 0.0
    %v1317 = vadd.f32 %v1315, %v1316
    %v1318 = vsel %vm1306, %v887, 0.0
    %v1319 = vadd.f32 %v1317, %v1318
    %v1320 = vsel %vm1306, %v933, 0.0
    %v1321 = vadd.f32 %v1319, %v1320
    %v1322 = vsel %vm1306, %v979, 0.0
    %v1323 = vadd.f32 %v1321, %v1322
    %v1324 = vsel %vm1306, %v1025, 0.0
    %v1325 = vadd.f32 %v1323, %v1324
    %v1326 = vsel %vm1306, %v1071, 0.0
    %v1327 = vadd.f32 %v1325, %v1326
    %v1328 = vsel %vm1306, %v1117, 0.0
    %v1329 = vadd.f32 %v1327, %v1328
    %v1330 = vsel %vm1306, %v1163, 0.0
    %v1331 = vadd.f32 %v1329, %v1330
    %v1332 = vsel %vm1306, %v1209, 0.0
    %v1333 = vadd.f32 %v1331, %v1332
    %v1334 = vsel %vm1306, %v1255, 0.0
    %v1335 = vadd.f32 %v1333, %v1334
    %v1336 = vsel %vm1306, %v1301, 0.0
    %v1337 = vadd.f32 %v1335, %v1336
    %v1338 = vld [vmem:[#allocation12] sm:$0x1]
    %v1340 = vlaneseq
    %v1341 = vshrl.u32 %v1340, 7
    %v1342 = vsub.s32 0, %v1341
    %v1343 = vrot.slane %v1338, %v1342
    %v1345 = vadd.f32 %v1337, %v1343
    %v1346 = vmax.f32 %v1345, 0.0
    %v1347 = vpack.c.bf16 %v1346, %v1346
    %v1348 = vld [vmem:[%s7] sm:$0xf]
    %v1349 = vld [vmem:[%s7 + $0x4] sm:$0xf]
    %v1350 = vld [vmem:[#allocation14] sm:$0x1]
    %v1352 = vlaneseq
    %v1353 = vshrl.u32 %v1352, 7
    %v1354 = vsub.s32 0, %v1353
    %v1355 = vrot.slane %v1350, %v1354
    %v1359 = vunpack.c.l.b16 %v1348
    %v1360 = vunpack.c.l.b16 %v1349
    %v1361 = vpack.c.b16 %v1360, %v1359
    %vm1363 = vcmask 130048
    %v1365 = vsel %vm1363, %v1347, 0
    %1367 = vmatprep.subr.bf16.mxu0 0
    %1368 = vmatpush1.bf16.msra.mxu0 %v1361
    %1369 = vmatprep.subr.bf16.mxu0 0
    %1370 = vmatpush1.bf16.msra.mxu0 0
    %1371 = vmatprep.subr.bf16.mxu0 0
    %1372 = vmatpush1.bf16.msra.mxu0 0
    %1373 = vmatprep.subr.bf16.mxu0 0
    %1374 = vmatpush1.bf16.msra.mxu0 0
    %1375 = vmatprep.subr.bf16.mxu0 0
    %1376 = vmatpush1.bf16.msra.mxu0 0
    %1377 = vmatprep.subr.bf16.mxu0 0
    %1378 = vmatpush1.bf16.msra.mxu0 0
    %1379 = vmatprep.subr.bf16.mxu0 0
    %1380 = vmatpush1.bf16.msra.mxu0 0
    %1381 = vmatprep.subr.bf16.mxu0 0
    %1382 = vmatpush1.bf16.msra.mxu0 0
    %1383 = vmatprep.subr.bf16.mxu0 0
    %1384 = vmatpush1.bf16.msra.mxu0 0
    %1385 = vmatprep.subr.bf16.mxu0 0
    %1386 = vmatpush1.bf16.msra.mxu0 0
    %1387 = vmatprep.subr.bf16.mxu0 0
    %1388 = vmatpush1.bf16.msra.mxu0 0
    %1389 = vmatprep.subr.bf16.mxu0 0
    %1390 = vmatpush1.bf16.msra.mxu0 0
    %1391 = vmatprep.subr.bf16.mxu0 0
    %1392 = vmatpush1.bf16.msra.mxu0 0
    %1393 = vmatprep.subr.bf16.mxu0 0
    %1394 = vmatpush1.bf16.msra.mxu0 0
    %1395 = vmatprep.subr.bf16.mxu0 0
    %1396 = vmatpush1.bf16.msra.mxu0 0
    %1397 = vmatprep.subr.bf16.mxu0 0
    %1398 = vmatpush1.bf16.msra.mxu0 0
    %1399 = vmatprep.mubr.bf16.mxu0 0
    %1400 = vmatmul.mubr.bf16.gmra.mrb[0].mxu0 %v1365
    %v1401 = vpop.f32.mrb[0].mxu0
    %v1402 = vadd.f32 %v1355, %v1401
    %v1403 = vpop.f32.mrb[0].mxu0
    %v1404 = vpop.f32.mrb[0].mxu0
    %v1405 = vpop.f32.mrb[0].mxu0
    %1406 = vdwg.mxu0
    %v1407 = vmax.f32 %v1402, 0.0
    %v1409 = vrot.slane %v1407, 1
    %v1411 = vadd.s32 %v188, 4294967295
    %v1412 = vadd.s32 %v189, 4294967295
    %vm1413 = vcmp.ge.s32.totalorder %v1411, 0
    %vm1414 = vcmp.ge.s32.totalorder %v1412, 0
    %vm1415 = vcmp.lt.s32.totalorder %v1411, 128
    %vm1416 = vcmp.lt.s32.totalorder %v1412, 128
    %vm1417 = vmand %vm1413, %vm1415
    %vm1418 = vmand %vm1414, %vm1416
    %1419 = vrot.lane.b32.xlu0 %v1407, 1
    %v1420 = vpop.permute.xlu0 %1419
    %1421 = vrot.lane.b32.xlu0 %v1409, 1
    %v1422 = vpop.permute.xlu0 %1421
    %vm1423 = vcmp.lt.s32.totalorder %v164, 1
    %v1424 = vsel %vm1423, %v1420, %v1422
    %v1425 = vsel %vm1423, %v1422, %v1420
    %v1426 = vsel %vm1417, %v1425, 0.0
    %v1427 = vsel %vm1418, %v1424, 0.0
    %1428 = vrot.lane.b32.xlu0 %v1407, 127
    %v1429 = vpop.permute.xlu0 %1428
    %1430 = vrot.lane.b32.xlu0 %v1409, 127
    %v1431 = vpop.permute.xlu0 %1430
    %v1432 = vsel %vm213, %v1429, %v1431
    %v1433 = vsel %vm213, %v1431, %v1429
    %v1434 = vsel %vm196, %v1432, 0.0
    %v1435 = vsel %vm197, %v1433, 0.0
    %v1436 = vld [vmem:[%s9] sm:$0xff]
    %v1437 = vld [vmem:[%s9 + $0x8] sm:$0xff]
    %v1438 = vld [vmem:[%s10] sm:$0xff]
    %v1439 = vld [vmem:[%s10 + $0x8] sm:$0xff]
    %1441 = vset.pattern.permute.xlu0 0
    %1442 = vperm.xlu0 %1441, %v1438
    %v1443 = vpop.permute.xlu0 %1442
    %1446 = vset.pattern.permute.xlu0 0
    %1447 = vperm.xlu0 %1446, %v1439
    %v1448 = vpop.permute.xlu0 %1447
    %1451 = vset.pattern.permute.xlu0 0
    %1452 = vperm.xlu0 %1451, %v1436
    %v1453 = vpop.permute.xlu0 %1452
    %1456 = vset.pattern.permute.xlu0 0
    %1457 = vperm.xlu0 %1456, %v1437
    %v1458 = vpop.permute.xlu0 %1457
    %v1460 = vlaneseq
    %v1461 = vshrl.u32 %v1460, 7
    %v1462 = vsub.s32 0, %v1461
    %v1463 = vrot.slane %v1426, %v1462
    %v1464 = vlaneseq
    %v1465 = vshrl.u32 %v1464, 7
    %v1466 = vsub.s32 0, %v1465
    %v1467 = vrot.slane %v1427, %v1466
    %v1468 = vmul.f32 %v1453, %v1463
    %v1469 = vmul.f32 %v1453, %v1467
    %v1470 = vmul.f32 %v1458, %v1463
    %v1471 = vmul.f32 %v1458, %v1467
    %v1472 = vadd.f32 %v1443, %v1468
    %v1473 = vadd.f32 %v1443, %v1469
    %v1474 = vadd.f32 %v1448, %v1470
    %v1475 = vadd.f32 %v1448, %v1471
    %1476 = vset.pattern.permute.xlu0 1
    %1477 = vperm.xlu0 %1476, %v1436
    %v1478 = vpop.permute.xlu0 %1477
    %1480 = vset.pattern.permute.xlu0 1
    %1481 = vperm.xlu0 %1480, %v1437
    %v1482 = vpop.permute.xlu0 %1481
    %v1484 = vlaneseq
    %v1485 = vshrl.u32 %v1484, 7
    %v1486 = vsub.s32 0, %v1485
    %v1487 = vrot.slane %v1407, %v1486
    %v1488 = vlaneseq
    %v1489 = vshrl.u32 %v1488, 7
    %v1490 = vsub.s32 0, %v1489
    %v1491 = vrot.slane %v1409, %v1490
    %v1492 = vmul.f32 %v1478, %v1487
    %v1493 = vmul.f32 %v1478, %v1491
    %v1494 = vmul.f32 %v1482, %v1487
    %v1495 = vmul.f32 %v1482, %v1491
    %v1496 = vadd.f32 %v1472, %v1492
    %v1497 = vadd.f32 %v1473, %v1493
    %v1498 = vadd.f32 %v1474, %v1494
    %v1499 = vadd.f32 %v1475, %v1495
    %1500 = vset.pattern.permute.xlu0 2
    %1501 = vperm.xlu0 %1500, %v1436
    %v1502 = vpop.permute.xlu0 %1501
    %1504 = vset.pattern.permute.xlu0 2
    %1505 = vperm.xlu0 %1504, %v1437
    %v1506 = vpop.permute.xlu0 %1505
    %v1508 = vlaneseq
    %v1509 = vshrl.u32 %v1508, 7
    %v1510 = vsub.s32 0, %v1509
    %v1511 = vrot.slane %v1434, %v1510
    %v1512 = vlaneseq
    %v1513 = vshrl.u32 %v1512, 7
    %v1514 = vsub.s32 0, %v1513
    %v1515 = vrot.slane %v1435, %v1514
    %v1516 = vmul.f32 %v1502, %v1511
    %v1517 = vmul.f32 %v1502, %v1515
    %v1518 = vmul.f32 %v1506, %v1511
    %v1519 = vmul.f32 %v1506, %v1515
    %v1520 = vadd.f32 %v1496, %v1516
    %v1521 = vadd.f32 %v1497, %v1517
    %v1522 = vadd.f32 %v1498, %v1518
    %v1523 = vadd.f32 %v1499, %v1519
    %v1524 = vmax.f32 %v1520, 0.0
    %v1525 = vmax.f32 %v1521, 0.0
    %v1526 = vmax.f32 %v1522, 0.0
    %v1527 = vmax.f32 %v1523, 0.0
    %1528 = vrot.lane.b32.xlu0 %v1524, 1
    %v1529 = vpop.permute.xlu0 %1528
    %1530 = vrot.lane.b32.xlu0 %v1526, 1
    %v1531 = vpop.permute.xlu0 %1530
    %1532 = vrot.lane.b32.xlu0 %v1525, 1
    %v1533 = vpop.permute.xlu0 %1532
    %1534 = vrot.lane.b32.xlu0 %v1527, 1
    %v1535 = vpop.permute.xlu0 %1534
    %v1536 = vsel %vm1423, %v1529, %v1533
    %v1537 = vsel %vm1423, %v1531, %v1535
    %v1538 = vsel %vm1423, %v1533, %v1529
    %v1539 = vsel %vm1423, %v1535, %v1531
    %v1540 = vsel %vm1417, 1, 0
    %v1541 = vsel %vm1418, 1, 0
    %vm1542 = vcmp.eq.s32.totalorder %v1540, 1
    %vm1543 = vcmp.eq.s32.totalorder %v1541, 1
    %v1544 = vsel %vm1542, %v1538, 0.0
    %v1545 = vsel %vm1543, %v1536, 0.0
    %v1546 = vsel %vm1542, %v1539, 0.0
    %v1547 = vsel %vm1543, %v1537, 0.0
    %1548 = vrot.lane.b32.xlu0 %v1524, 127
    %v1549 = vpop.permute.xlu0 %1548
    %1550 = vrot.lane.b32.xlu0 %v1526, 127
    %v1551 = vpop.permute.xlu0 %1550
    %1552 = vrot.lane.b32.xlu0 %v1525, 127
    %v1553 = vpop.permute.xlu0 %1552
    %1554 = vrot.lane.b32.xlu0 %v1527, 127
    %v1555 = vpop.permute.xlu0 %1554
    %v1556 = vsel %vm213, %v1549, %v1553
    %v1557 = vsel %vm213, %v1551, %v1555
    %v1558 = vsel %vm213, %v1553, %v1549
    %v1559 = vsel %vm213, %v1555, %v1551
    %v1560 = vsel %vm293, %v1556, 0.0
    %v1561 = vsel %vm294, %v1558, 0.0
    %v1562 = vsel %vm293, %v1557, 0.0
    %v1563 = vsel %vm294, %v1559, 0.0
    %v1564 = vld [vmem:[#allocation15] sm:$0xf]
    %v1565 = vpack.c.bf16 %v1546, %v1544
    %v1566 = vpack.c.bf16 %v1547, %v1545
    %v1567 = vpack.c.bf16 %v1526, %v1524
    %v1568 = vpack.c.bf16 %v1527, %v1525
    %v1569 = vpack.c.bf16 %v1562, %v1560
    %v1570 = vpack.c.bf16 %v1563, %v1561
    %v1571 = vld [vmem:[#allocation17] sm:$0xff]
    %1573 = vset.pattern.permute.xlu0 0
    %1574 = vperm.xlu0 %1573, %v1571
    %v1575 = vpop.permute.xlu0 %1574
    %vm1577 = vcmask 392192
    %v1579 = vsel %vm1577, %v1564, 0
    %1581 = vmatprep.subr.bf16.mxu0 %v1566
    %1582 = vmatpush1.bf16.msra.mxu0 %v1565
    %1583 = vmatprep.subr.bf16.mxu0 %v1568
    %1584 = vmatpush1.bf16.msra.mxu0 %v1567
    %1585 = vmatprep.subr.bf16.mxu0 %v1570
    %1586 = vmatpush1.bf16.msra.mxu0 %v1569
    %1587 = vmatprep.subr.bf16.mxu0 0
    %1588 = vmatpush1.bf16.msra.mxu0 0
    %1589 = vmatprep.subr.bf16.mxu0 0
    %1590 = vmatpush1.bf16.msra.mxu0 0
    %1591 = vmatprep.subr.bf16.mxu0 0
    %1592 = vmatpush1.bf16.msra.mxu0 0
    %1593 = vmatprep.subr.bf16.mxu0 0
    %1594 = vmatpush1.bf16.msra.mxu0 0
    %1595 = vmatprep.subr.bf16.mxu0 0
    %1596 = vmatpush1.bf16.msra.mxu0 0
    %1597 = vmatprep.subr.bf16.mxu0 0
    %1598 = vmatpush1.bf16.msra.mxu0 0
    %1599 = vmatprep.subr.bf16.mxu0 0
    %1600 = vmatpush1.bf16.msra.mxu0 0
    %1601 = vmatprep.subr.bf16.mxu0 0
    %1602 = vmatpush1.bf16.msra.mxu0 0
    %1603 = vmatprep.subr.bf16.mxu0 0
    %1604 = vmatpush1.bf16.msra.mxu0 0
    %1605 = vmatprep.subr.bf16.mxu0 0
    %1606 = vmatpush1.bf16.msra.mxu0 0
    %1607 = vmatprep.subr.bf16.mxu0 0
    %1608 = vmatpush1.bf16.msra.mxu0 0
    %1609 = vmatprep.subr.bf16.mxu0 0
    %1610 = vmatpush1.bf16.msra.mxu0 0
    %1611 = vmatprep.subr.bf16.mxu0 0
    %1612 = vmatpush1.bf16.msra.mxu0 0
    %1613 = vmatprep.mubr.bf16.mxu0 0
    %1614 = vmatmul.mubr.bf16.gmra.mrb[0].mxu0 %v1579
    %v1615 = vpop.f32.mrb[0].mxu0
    %v1616 = vadd.f32 %v1575, %v1615
    %v1617 = vpop.f32.mrb[0].mxu0
    %v1618 = vadd.f32 %v1575, %v1617
    %v1619 = vpop.f32.mrb[0].mxu0
    %v1620 = vpop.f32.mrb[0].mxu0
    %1621 = vdwg.mxu0
    %v1622 = vmax.f32 %v1616, 0.0
    %v1623 = vmax.f32 %v1618, 0.0
    %v1624 = vld [vmem:[%s13] sm:$0x1]
    %v1625 = vpack.c.bf16 %v1622, %v1622
    %v1626 = vpack.c.bf16 %v1623, %v1623
    %v1627 = vld [vmem:[#allocation2] sm:$0x1]
    %1629 = vset.pattern.permute.xlu0 0
    %1630 = vperm.xlu0 %1629, %v1627
    %v1631 = vpop.permute.xlu0 %1630
    %v1633 = vlaneseq
    %v1634 = vshrl.u32 %v1633, 7
    %v1635 = vsub.s32 0, %v1634
    %v1636 = vrot.slane %v1631, %v1635
    %vm1637 = vcmask 64512
    %v1639 = vsel %vm1637, %v1624, 0
    %v1642 = vsel %vm336, %v1625, 0
    %v1645 = vsel %vm336, %v1626, 0
    %1647 = vmatprep.subr.bf16.mxu0 %v1645
    %1648 = vmatpush1.bf16.msra.mxu0 %v1642
    %1649 = vmatprep.subr.bf16.mxu0 0
    %1650 = vmatpush1.bf16.msra.mxu0 0
    %1651 = vmatprep.subr.bf16.mxu0 0
    %1652 = vmatpush1.bf16.msra.mxu0 0
    %1653 = vmatprep.subr.bf16.mxu0 0
    %1654 = vmatpush1.bf16.msra.mxu0 0
    %1655 = vmatprep.subr.bf16.mxu0 0
    %1656 = vmatpush1.bf16.msra.mxu0 0
    %1657 = vmatprep.subr.bf16.mxu0 0
    %1658 = vmatpush1.bf16.msra.mxu0 0
    %1659 = vmatprep.subr.bf16.mxu0 0
    %1660 = vmatpush1.bf16.msra.mxu0 0
    %1661 = vmatprep.subr.bf16.mxu0 0
    %1662 = vmatpush1.bf16.msra.mxu0 0
    %1663 = vmatprep.subr.bf16.mxu0 0
    %1664 = vmatpush1.bf16.msra.mxu0 0
    %1665 = vmatprep.subr.bf16.mxu0 0
    %1666 = vmatpush1.bf16.msra.mxu0 0
    %1667 = vmatprep.subr.bf16.mxu0 0
    %1668 = vmatpush1.bf16.msra.mxu0 0
    %1669 = vmatprep.subr.bf16.mxu0 0
    %1670 = vmatpush1.bf16.msra.mxu0 0
    %1671 = vmatprep.subr.bf16.mxu0 0
    %1672 = vmatpush1.bf16.msra.mxu0 0
    %1673 = vmatprep.subr.bf16.mxu0 0
    %1674 = vmatpush1.bf16.msra.mxu0 0
    %1675 = vmatprep.subr.bf16.mxu0 0
    %1676 = vmatpush1.bf16.msra.mxu0 0
    %1677 = vmatprep.subr.bf16.mxu0 0
    %1678 = vmatpush1.bf16.msra.mxu0 0
    %1679 = vmatprep.mubr.bf16.mxu0 0
    %1680 = vmatmul.mubr.bf16.gmra.mrb[0].mxu0 %v1639
    %v1681 = vpop.f32.mrb[0].mxu0
    %v1682 = vadd.f32 %v1636, %v1681
    %v1683 = vpop.f32.mrb[0].mxu0
    %v1684 = vadd.f32 %v1636, %v1683
    %v1685 = vpop.f32.mrb[0].mxu0
    %v1686 = vpop.f32.mrb[0].mxu0
    %1687 = vdwg.mxu0
    %v1690 = vcombine.low %v1682, %v1684
    %v1692 = vunpack.c.l.s4 1966171168
    %v1693 = vunpack.c.0.s8 %v1692
    %v1694 = vlaneseq
    %v1695 = vshrl.u32 %v1694, 7
    %v1696 = vsub.s32 %v1693, %v1695
    %v1697 = vrot.slane %v1690, %v1696
    %v1699 = vunpack.c.l.s4 1966171168
    %v1700 = vunpack.c.0.s8 %v1699
    %v1701 = vlaneseq
    %v1702 = vshrl.u32 %v1701, 7
    %v1703 = vsub.s32 %v1700, %v1702
    %v1704 = vrot.slane %v1697, %v1703
    %v1706 = vlaneseq
    %vm1707 = vcmp.ge.s32.totalorder %v1706, 0
    %vm1708 = vcmp.lt.s32.totalorder %v1706, 256
    %vm1709 = vmand %vm1707, %vm1708
    %1710 = vst.msk [vmem:[#allocation18] sm:$0x3] %vm1709, %v1704
    // Predicated region
    $region98: #{_lambda_.1} parent=1 // pred_check
      _
    $region99: #{_lambda_.1} parent=1 // pred_check_branch
      %1712 = sbr.rel (0) target = $region101
    $region100: #{_lambda_.1} parent=1 // pred_region
      %s1714 = ssub.s32 32, 32
      %1715 = vsyncadd [#allocation5], %s1714
      %s1717 = sshll.u32 [#allocation18], 4
      %s1718 = int_to_ptr.vmem [resolvable:$true] %s1717
      %1720 = dma.vmem_to_hbm [thread:$0]  %s1718, 32, %s15, [#allocation5]
    $region101: #{_lambda_.1} parent=1 // pred_fallthru
      _
    // Predicated region
    $region102: #{_lambda_.1} parent=1 // pred_check
      _
    $region103: #{_lambda_.1} parent=1 // pred_check_branch
      %1722 = sbr.rel (0) target = $region105
    $region104: #{_lambda_.1} parent=1 // pred_region
      %1723 = dma.done [#allocation5], 32
    $region105: #{_lambda_.1} parent=1 // pred_fallthru
      _
    %1724 = vsyncpa [#allocation4], 1
    %1725 = vsyncpa [#allocation7], 1
    %1726 = vsyncpa [#allocation10], 1
    %1727 = vsyncpa [#allocation13], 1
    %1728 = vsyncpa [#allocation16], 1
    %1729 = vsyncpa [#allocation5], 1

</llo_original>
